<compile_context>
chip_gen: v7x
topology: tpu7x:2x2x1
jax: 0.10.0
libtpu: 0.0.40
codegen_flags: <defaults>
</compile_context>

<pallas_src>
import functools
import math

import jax
import jax.numpy as jnp
from jax.experimental import pallas as pl
from jax.experimental.pallas import tpu as pltpu


# --------------------------------------------------------------------------- #
# VMEM sizing helpers
# --------------------------------------------------------------------------- #
def _vmem_capacity_bytes():
    try:
        return int(pltpu.get_tpu_info().vmem_capacity_bytes)
    except Exception:
        return 64 * 1024 * 1024  # conservative (v7x per-core physical VMEM)


def _pick_row_tile(d, vmem_capacity_bytes):
    """Largest row tile (multiple of 128, <=2048) that fits the VMEM budget."""
    budget = vmem_capacity_bytes // 4          # leave room for weights + pipeline
    per_row = 4 * (2 * 2 * d                   # xs + es tiles, double-buffered f32
                   + 2 * 2 * 41                # labels (39 + 1 + 1), double-buffered
                   + 2 * d + d                 # hx + hb f32 intermediates
                   + (3 * d) // 2              # bf16 copies of x / h halves
                   + 2 * 41 + 64)              # logits + BCE temporaries + slack
    tile = budget // max(per_row, 1)
    tile = max(128, min(2048, (tile // 128) * 128))
    return int(tile)


# --------------------------------------------------------------------------- #
# Forward wrapper + kernel
# --------------------------------------------------------------------------- #
def comp_identify_forward(fused, xs, es, label_fg, label_brics, label_scaffold,
                          *, row_tile=None):
    """CompIdentify.forward: returns (loss_comp, (loss_fg, loss_brics, loss_scaffold))."""
    f32 = jnp.float32
    bf16 = jnp.bfloat16

    n, d = xs.shape
    e = es.shape[0]
    n_fg = fused["fg_w2"].shape[1]             # 39

    yfg = label_fg if label_fg.dtype == f32 else label_fg.astype(f32)
    ysc = label_scaffold if label_scaffold.dtype == f32 else label_scaffold.astype(f32)
    ybr = label_brics if label_brics.dtype == f32 else label_brics.astype(f32)

    cap = _vmem_capacity_bytes()
    tile = int(row_tile) if row_tile is not None else _pick_row_tile(d, cap)
    vmem_limit = min(int(cap * 3 // 4), 128 * 1024 * 1024)

    def cdiv(a, b):
        return (a + b - 1) // b

    nx = max(1, cdiv(n, tile))                 # xs row blocks
    ne = max(1, cdiv(e, tile))                 # es row blocks
    ncores = 2                                 # 2 TCs on v7x; cheap serial split elsewhere
    nsteps = max(1, cdiv(max(nx, ne), ncores)) # inner (reduction) axis length

    def kernel(xs_ref, lfg_ref, lsc_ref, es_ref, lbr_ref,
               w1x_ref, b1x_ref, fgw2_ref, fgb2_ref, scw2_ref, scb2_ref,
               brw1_ref, brb1_ref, brw2_ref, brb2_ref,
               out_ref, acc_fg, acc_sc, acc_br):
        c = pl.program_id(0)
        i = pl.program_id(1)

        @pl.when(i == 0)
        def _():
            acc_fg[...] = jnp.zeros_like(acc_fg)
            acc_sc[...] = jnp.zeros_like(acc_sc)
            acc_br[...] = jnp.zeros_like(acc_br)

        blk = c * nsteps + i                   # logical row block (may exceed nx / ne)
        row0 = blk * tile
        rows = jax.lax.broadcasted_iota(jnp.int32, (tile, 1), 0) + row0

        def bce(z, y):
            # numerically-stable BCEWithLogits: max(z,0) - z*y + log1p(exp(-|z|))
            return jnp.maximum(z, 0.0) - z * y + jnp.log1p(jnp.exp(-jnp.abs(z)))

        def sum11(v):
            return jnp.sum(jnp.sum(v, axis=1, keepdims=True), axis=0, keepdims=True)

        # ---- fg + scaffold heads on this xs row tile ------------------------
        @pl.when(row0 < n)
        def _():
            x16 = xs_ref[...].astype(bf16)
            h = jnp.dot(x16, w1x_ref[...], preferred_element_type=f32) + b1x_ref[...]
            h = jnp.maximum(h, 0.0).astype(bf16)           # [tile, 2D]
            z_fg = jnp.dot(h[:, :d], fgw2_ref[...],
                           preferred_element_type=f32) + fgb2_ref[...]   # [tile, 39]
            z_sc = jnp.dot(h[:, d:], scw2_ref[...],
                           preferred_element_type=f32) + scb2_ref[...]   # [tile, 1]
            m = rows < n                                    # mask trailing partial-tile rows
            acc_fg[...] += sum11(jnp.where(m, bce(z_fg, lfg_ref[...]), 0.0))
            acc_sc[...] += sum11(jnp.where(m, bce(z_sc, lsc_ref[...]), 0.0))

        # ---- brics head on this es row tile ----------------------------------
        @pl.when(row0 < e)
        def _():
            e16 = es_ref[...].astype(bf16)
            hb = jnp.dot(e16, brw1_ref[...], preferred_element_type=f32) + brb1_ref[...]
            hb = jnp.maximum(hb, 0.0).astype(bf16)          # [tile, D]
            z_br = jnp.dot(hb, brw2_ref[...],
                           preferred_element_type=f32) + brb2_ref[...]   # [tile, 1]
            m = rows < e
            acc_br[...] += sum11(jnp.where(m, bce(z_br, lbr_ref[...]), 0.0))

        # ---- finalize: scale sums once, lane-dense store of the 4 partials ---
        @pl.when(i == nsteps - 1)
        def _():
            loss_fg = acc_fg[...] * (1.0 / (n * n_fg))
            loss_sc = acc_sc[...] * (1.0 / n)
            loss_br = acc_br[...] * (1.0 / e)
            loss_comp = loss_fg + loss_br + loss_sc
            lane = jax.lax.broadcasted_iota(jnp.int32, (1, 8, 128), 2)
            out_ref[...] = (jnp.where(lane == 0, loss_comp, 0.0)
                            + jnp.where(lane == 1, loss_fg, 0.0)
                            + jnp.where(lane == 2, loss_br, 0.0)
                            + jnp.where(lane == 3, loss_sc, 0.0))

    def xrow(c, i):
        return (jnp.minimum(c * nsteps + i, nx - 1), 0)

    def erow(c, i):
        return (jnp.minimum(c * nsteps + i, ne - 1), 0)

    def const(c, i):
        return (0, 0)

    operands = (
        xs, yfg, ysc, es, ybr,
        fused["x_w1"], fused["x_b1"],
        fused["fg_w2"], fused["fg_b2"], fused["sc_w2"], fused["sc_b2"],
        fused["br_w1"], fused["br_b1"], fused["br_w2"], fused["br_b2"],
    )
    in_specs = [
        pl.BlockSpec((tile, d), xrow),          # xs
        pl.BlockSpec((tile, n_fg), xrow),       # label_fg
        pl.BlockSpec((tile, 1), xrow),          # label_scaffold
        pl.BlockSpec((tile, d), erow),          # es
        pl.BlockSpec((tile, 1), erow),          # label_brics
        pl.BlockSpec((d, 2 * d), const),        # x_w1   (bf16)
        pl.BlockSpec((1, 2 * d), const),        # x_b1
        pl.BlockSpec((d, n_fg), const),         # fg_w2  (bf16)
        pl.BlockSpec((1, n_fg), const),         # fg_b2
        pl.BlockSpec((d, 1), const),            # sc_w2  (bf16)
        pl.BlockSpec((1, 1), const),            # sc_b2
        pl.BlockSpec((d, d), const),            # br_w1  (bf16)
        pl.BlockSpec((1, d), const),            # br_b1
        pl.BlockSpec((d, 1), const),            # br_w2  (bf16)
        pl.BlockSpec((1, 1), const),            # br_b2
    ]

    flops = (2 * n * d * (2 * d) + 2 * n * d * n_fg + 2 * n * d * 1
             + 2 * e * d * d + 2 * e * d * 1)
    transcendentals = 2 * (n * (n_fg + 1) + e)
    bytes_accessed = sum(
        math.prod(a.shape) * jnp.dtype(a.dtype).itemsize for a in operands
    ) + ncores * 8 * 128 * 4

    out = pl.pallas_call(
        kernel,
        grid=(ncores, nsteps),
        out_shape=jax.ShapeDtypeStruct((ncores, 8, 128), f32),
        in_specs=in_specs,
        out_specs=pl.BlockSpec((1, 8, 128), lambda c, i: (c, 0, 0)),
        scratch_shapes=[pltpu.VMEM((1, 1), f32)] * 3,
        compiler_params=pltpu.CompilerParams(
            dimension_semantics=("parallel", "arbitrary"),
            vmem_limit_bytes=vmem_limit,
        ),
        cost_estimate=pl.CostEstimate(
            flops=flops,
            transcendentals=transcendentals,
            bytes_accessed=bytes_accessed,
        ),
    )(*operands)

    totals = jnp.sum(out[:, 0, :4], axis=0)     # add the per-core partials
    loss_comp = totals[0]
    return loss_comp, (totals[1], totals[2], totals[3])


# --------------------------------------------------------------------------- #
# Parameter init (torch xavier_uniform + zero bias) and one-time weight fusion
# --------------------------------------------------------------------------- #
def xavier_uniform(key, fan_in, fan_out, dtype=jnp.float32):
    bound = math.sqrt(6.0 / (fan_in + fan_out))
    # stored as [in, out] so the kernel computes x @ W (== torch x @ W.T, W:[out,in])
    return jax.random.uniform(key, (fan_in, fan_out), dtype, -bound, bound)


def init_comp_identify_params(key, in_dim):
    ks = jax.random.split(key, 6)
    return {
        # proj_fg: Linear(in_dim,in_dim) -> ReLU -> Linear(in_dim,39)
        "fg_w1": xavier_uniform(ks[0], in_dim, in_dim),
        "fg_b1": jnp.zeros((1, in_dim), jnp.float32),
        "fg_w2": xavier_uniform(ks[1], in_dim, 39),
        "fg_b2": jnp.zeros((1, 39), jnp.float32),
        # proj_brics: Linear(in_dim,in_dim) -> ReLU -> Linear(in_dim,1)
        "br_w1": xavier_uniform(ks[2], in_dim, in_dim),
        "br_b1": jnp.zeros((1, in_dim), jnp.float32),
        "br_w2": xavier_uniform(ks[3], in_dim, 1),
        "br_b2": jnp.zeros((1, 1), jnp.float32),
        # proj_scaffold: Linear(in_dim,in_dim) -> ReLU -> Linear(in_dim,1)
        "sc_w1": xavier_uniform(ks[4], in_dim, in_dim),
        "sc_b1": jnp.zeros((1, in_dim), jnp.float32),
        "sc_w2": xavier_uniform(ks[5], in_dim, 1),
        "sc_b2": jnp.zeros((1, 1), jnp.float32),
    }


def fuse_comp_identify_params(params):
    """One-time, out-of-the-hot-path weight prep: fuse the xs-head layer-1
    weights and cast all MXU operands to bf16 (biases stay f32)."""
    bf16, f32 = jnp.bfloat16, jnp.float32
    return {
        "x_w1": jnp.concatenate([params["fg_w1"], params["sc_w1"]], axis=1).astype(bf16),
        "x_b1": jnp.concatenate([params["fg_b1"], params["sc_b1"]], axis=1).astype(f32),
        "fg_w2": params["fg_w2"].astype(bf16),
        "fg_b2": params["fg_b2"].astype(f32),
        "sc_w2": params["sc_w2"].astype(bf16),
        "sc_b2": params["sc_b2"].astype(f32),
        "br_w1": params["br_w1"].astype(bf16),
        "br_b1": params["br_b1"].astype(f32),
        "br_w2": params["br_w2"].astype(bf16),
        "br_b2": params["br_b2"].astype(f32),
    }


# --------------------------------------------------------------------------- #
# Demo / correctness check
# --------------------------------------------------------------------------- #
if __name__ == "__main__":
    key = jax.random.PRNGKey(0)
    k_param, k_xs, k_es, k_lfg, k_lbr, k_lsc = jax.random.split(key, 6)

    in_dim = 32   # hidden size
    N = 200       # number of (unmasked) nodes
    E = 300       # number of (unmasked) edges

    params = init_comp_identify_params(k_param, in_dim)
    fused = jax.tree_util.tree_map(jnp.asarray, fuse_comp_identify_params(params))

    xs = jax.random.normal(k_xs, (N, in_dim), jnp.float32)
    es = jax.random.normal(k_es, (E, in_dim), jnp.float32)
    label_fg = jax.random.bernoulli(k_lfg, 0.3, (N, 39)).astype(jnp.float32)
    label_brics = jax.random.bernoulli(k_lbr, 0.5, (E, 1)).astype(jnp.float32)
    label_scaffold = jax.random.bernoulli(k_lsc, 0.5, (N, 1)).astype(jnp.float32)

    # small row tile here to exercise the tiled grid / partial-tile masking at
    # toy sizes; at realistic sizes leave row_tile=None for the VMEM-aware pick.
    fwd = jax.jit(functools.partial(comp_identify_forward, row_tile=64))
    loss_comp, (loss_fg, loss_brics, loss_scaffold) = fwd(
        fused, xs, es, label_fg, label_brics, label_scaffold
    )
    jax.block_until_ready(loss_comp)

    # equivalent of the torch `.item()` list return
    _loss_list = [float(loss_fg), float(loss_brics), float(loss_scaffold)]
    _ = float(loss_comp)

    # plain-JAX f32 per-head reference (kernel runs the matmuls in bf16 with
    # f32 accumulation, so use a bf16-aware tolerance)
    def _ref_head(x, w1, b1, w2, b2, y):
        h = jnp.maximum(x @ w1 + b1, 0.0)
        z = h @ w2 + b2
        return jnp.mean(jnp.maximum(z, 0.0) - z * y + jnp.log1p(jnp.exp(-jnp.abs(z))))

    ref_fg = _ref_head(xs, params["fg_w1"], params["fg_b1"],
                       params["fg_w2"], params["fg_b2"], label_fg)
    ref_br = _ref_head(es, params["br_w1"], params["br_b1"],
                       params["br_w2"], params["br_b2"], label_brics)
    ref_sc = _ref_head(xs, params["sc_w1"], params["sc_b1"],
                       params["sc_w2"], params["sc_b2"], label_scaffold)
    ref_comp = ref_fg + ref_br + ref_sc

    def _close(a, b, tol=5e-3, rtol=0.01):
        return abs(float(a) - float(b)) < tol + rtol * abs(float(b))

    assert _close(loss_fg, ref_fg), (float(loss_fg), float(ref_fg))
    assert _close(loss_brics, ref_br), (float(loss_brics), float(ref_br))
    assert _close(loss_scaffold, ref_sc), (float(loss_scaffold), float(ref_sc))
    assert _close(loss_comp, ref_comp), (float(loss_comp), float(ref_comp))

    print("KERNEL_OK")
</pallas_src>

<mosaic_0001>
module attributes {stable_mosaic.version = 11 : i64} {
  func.func @kernel(%arg0: i32, %arg1: i32, %arg2: memref<64x32xf32, #tpu.memory_space<vmem>>, %arg3: memref<64x39xf32, #tpu.memory_space<vmem>>, %arg4: memref<64x1xf32, #tpu.memory_space<vmem>>, %arg5: memref<64x32xf32, #tpu.memory_space<vmem>>, %arg6: memref<64x1xf32, #tpu.memory_space<vmem>>, %arg7: memref<32x64xbf16, #tpu.memory_space<vmem>>, %arg8: memref<1x64xf32, #tpu.memory_space<vmem>>, %arg9: memref<32x39xbf16, #tpu.memory_space<vmem>>, %arg10: memref<1x39xf32, #tpu.memory_space<vmem>>, %arg11: memref<32x1xbf16, #tpu.memory_space<vmem>>, %arg12: memref<1x1xf32, #tpu.memory_space<vmem>>, %arg13: memref<32x32xbf16, #tpu.memory_space<vmem>>, %arg14: memref<1x32xf32, #tpu.memory_space<vmem>>, %arg15: memref<32x1xbf16, #tpu.memory_space<vmem>>, %arg16: memref<1x1xf32, #tpu.memory_space<vmem>>, %arg17: memref<1x8x128xf32, #tpu.memory_space<vmem>>, %arg18: memref<1x1xf32, #tpu.memory_space<vmem>>, %arg19: memref<1x1xf32, #tpu.memory_space<vmem>>, %arg20: memref<1x1xf32, #tpu.memory_space<vmem>>) attributes {dimension_semantics = [#tpu.dimension_semantics<parallel>, #tpu.dimension_semantics<arbitrary>], iteration_bounds = array<i64: 2, 3>, scalar_prefetch = 0 : i64, scratch_operands = 3 : i64, tpu.core_type = #tpu.core_type<tc>, window_params = [{transform_indices = @transform_0, window_bounds = array<i64: 64, 32>}, {transform_indices = @transform_1, window_bounds = array<i64: 64, 39>}, {transform_indices = @transform_2, window_bounds = array<i64: 64, 1>}, {transform_indices = @transform_3, window_bounds = array<i64: 64, 32>}, {transform_indices = @transform_4, window_bounds = array<i64: 64, 1>}, {pipeline_mode = #tpu.pipeline_mode<synchronous>, transform_indices = @transform_5, window_bounds = array<i64: 32, 64>}, {pipeline_mode = #tpu.pipeline_mode<synchronous>, transform_indices = @transform_6, window_bounds = array<i64: 1, 64>}, {pipeline_mode = #tpu.pipeline_mode<synchronous>, transform_indices = @transform_7, window_bounds = array<i64: 32, 39>}, {pipeline_mode = #tpu.pipeline_mode<synchronous>, transform_indices = @transform_8, window_bounds = array<i64: 1, 39>}, {pipeline_mode = #tpu.pipeline_mode<synchronous>, transform_indices = @transform_9, window_bounds = array<i64: 32, 1>}, {pipeline_mode = #tpu.pipeline_mode<synchronous>, transform_indices = @transform_10, window_bounds = array<i64: 1, 1>}, {pipeline_mode = #tpu.pipeline_mode<synchronous>, transform_indices = @transform_11, window_bounds = array<i64: 32, 32>}, {pipeline_mode = #tpu.pipeline_mode<synchronous>, transform_indices = @transform_12, window_bounds = array<i64: 1, 32>}, {pipeline_mode = #tpu.pipeline_mode<synchronous>, transform_indices = @transform_13, window_bounds = array<i64: 32, 1>}, {pipeline_mode = #tpu.pipeline_mode<synchronous>, transform_indices = @transform_14, window_bounds = array<i64: 1, 1>}, {transform_indices = @transform_15, window_bounds = array<i64: 1, 8, 128>}]} {
    %c0_i32 = arith.constant 0 : i32
    %0 = arith.cmpi eq, %arg1, %c0_i32 : i32
    %1 = arith.extui %0 : i1 to i32
    %c0_i32_0 = arith.constant 0 : i32
    %2 = arith.cmpi ne, %1, %c0_i32_0 : i32
    scf.if %2 {
      %cst = arith.constant 0.000000e+00 : f32
      %18 = vector.broadcast %cst : f32 to vector<1x1xf32>
      %c0 = arith.constant 0 : index
      %c0_4 = arith.constant 0 : index
      %19 = vector.load %arg18[%c0, %c0_4] : memref<1x1xf32, #tpu.memory_space<vmem>>, vector<1x1xf32>
      tpu.vector_store %arg18[%c0, %c0_4], %18 {strides = array<i32>} : memref<1x1xf32, #tpu.memory_space<vmem>>, vector<1x1xf32>,
      %cst_5 = arith.constant 0.000000e+00 : f32
      %20 = vector.broadcast %cst_5 : f32 to vector<1x1xf32>
      %c0_6 = arith.constant 0 : index
      %c0_7 = arith.constant 0 : index
      %21 = vector.load %arg19[%c0_6, %c0_7] : memref<1x1xf32, #tpu.memory_space<vmem>>, vector<1x1xf32>
      tpu.vector_store %arg19[%c0_6, %c0_7], %20 {strides = array<i32>} : memref<1x1xf32, #tpu.memory_space<vmem>>, vector<1x1xf32>,
      %cst_8 = arith.constant 0.000000e+00 : f32
      %22 = vector.broadcast %cst_8 : f32 to vector<1x1xf32>
      %c0_9 = arith.constant 0 : index
      %c0_10 = arith.constant 0 : index
      %23 = vector.load %arg20[%c0_9, %c0_10] : memref<1x1xf32, #tpu.memory_space<vmem>>, vector<1x1xf32>
      tpu.vector_store %arg20[%c0_9, %c0_10], %22 {strides = array<i32>} : memref<1x1xf32, #tpu.memory_space<vmem>>, vector<1x1xf32>,
    } else {
    }
    %c3_i32 = arith.constant 3 : i32
    %3 = arith.muli %arg0, %c3_i32 : i32
    %4 = arith.addi %3, %arg1 : i32
    %c64_i32 = arith.constant 64 : i32
    %5 = arith.muli %4, %c64_i32 : i32
    %6 = tpu.iota {dimensions = array<i32: 0>} : vector<64x1xi32>
    %7 = vector.broadcast %5 : i32 to vector<64x1xi32>
    %8 = arith.addi %6, %7 : vector<64x1xi32>
    %c200_i32 = arith.constant 200 : i32
    %9 = arith.cmpi slt, %5, %c200_i32 : i32
    %10 = arith.extui %9 : i1 to i32
    %c0_i32_1 = arith.constant 0 : i32
    %11 = arith.cmpi ne, %10, %c0_i32_1 : i32
    scf.if %11 {
      %c0 = arith.constant 0 : index
      %c0_4 = arith.constant 0 : index
      %18 = vector.load %arg2[%c0, %c0_4] : memref<64x32xf32, #tpu.memory_space<vmem>>, vector<64x32xf32>
      %19 = arith.truncf %18 : vector<64x32xf32> to vector<64x32xbf16>
      %c0_5 = arith.constant 0 : index
      %c0_6 = arith.constant 0 : index
      %20 = vector.load %arg7[%c0_5, %c0_6] : memref<32x64xbf16, #tpu.memory_space<vmem>>, vector<32x64xbf16>
      %cst = arith.constant dense<0.000000e+00> : vector<64x64xf32>
      %21 = tpu.matmul %19, %20, %cst {dimension_numbers = #tpu.dot_dimension_numbers<[1], [0], [0], [1], [0, 0, 1, 1], [], []>} : vector<64x32xbf16>, vector<32x64xbf16>, vector<64x64xf32> -> vector<64x64xf32>
      %c0_7 = arith.constant 0 : index
      %c0_8 = arith.constant 0 : index
      %22 = vector.load %arg8[%c0_7, %c0_8] : memref<1x64xf32, #tpu.memory_space<vmem>>, vector<1x64xf32>
      %23 = vector.broadcast %22 : vector<1x64xf32> to vector<64x64xf32>
      %24 = arith.addf %21, %23 : vector<64x64xf32>
      %cst_9 = arith.constant 0.000000e+00 : f32
      %25 = vector.broadcast %cst_9 : f32 to vector<64x64xf32>
      %26 = arith.maximumf %24, %25 : vector<64x64xf32>
      %27 = arith.truncf %26 : vector<64x64xf32> to vector<64x64xbf16>
      %28 = vector.extract_strided_slice %27 {offsets = [0, 0], sizes = [64, 32], strides = [1, 1]} : vector<64x64xbf16> to vector<64x32xbf16>
      %c0_10 = arith.constant 0 : index
      %c0_11 = arith.constant 0 : index
      %29 = vector.load %arg9[%c0_10, %c0_11] : memref<32x39xbf16, #tpu.memory_space<vmem>>, vector<32x39xbf16>
      %cst_12 = arith.constant dense<0.000000e+00> : vector<64x39xf32>
      %30 = tpu.matmul %28, %29, %cst_12 {dimension_numbers = #tpu.dot_dimension_numbers<[1], [0], [0], [1], [0, 0, 1, 1], [], []>} : vector<64x32xbf16>, vector<32x39xbf16>, vector<64x39xf32> -> vector<64x39xf32>
      %c0_13 = arith.constant 0 : index
      %c0_14 = arith.constant 0 : index
      %31 = vector.load %arg10[%c0_13, %c0_14] : memref<1x39xf32, #tpu.memory_space<vmem>>, vector<1x39xf32>
      %32 = vector.broadcast %31 : vector<1x39xf32> to vector<64x39xf32>
      %33 = arith.addf %30, %32 : vector<64x39xf32>
      %34 = vector.extract_strided_slice %27 {offsets = [0, 32], sizes = [64, 32], strides = [1, 1]} : vector<64x64xbf16> to vector<64x32xbf16>
      %c0_15 = arith.constant 0 : index
      %c0_16 = arith.constant 0 : index
      %35 = vector.load %arg11[%c0_15, %c0_16] : memref<32x1xbf16, #tpu.memory_space<vmem>>, vector<32x1xbf16>
      %cst_17 = arith.constant dense<0.000000e+00> : vector<64x1xf32>
      %36 = tpu.matmul %34, %35, %cst_17 {dimension_numbers = #tpu.dot_dimension_numbers<[1], [0], [0], [1], [0, 0, 1, 1], [], []>} : vector<64x32xbf16>, vector<32x1xbf16>, vector<64x1xf32> -> vector<64x1xf32>
      %c0_18 = arith.constant 0 : index
      %c0_19 = arith.constant 0 : index
      %37 = vector.load %arg12[%c0_18, %c0_19] : memref<1x1xf32, #tpu.memory_space<vmem>>, vector<1x1xf32>
      %38 = vector.broadcast %37 : vector<1x1xf32> to vector<64x1xf32>
      %39 = arith.addf %36, %38 : vector<64x1xf32>
      %c200_i32_20 = arith.constant 200 : i32
      %40 = vector.broadcast %c200_i32_20 : i32 to vector<64x1xi32>
      %41 = arith.cmpi slt, %8, %40 : vector<64x1xi32>
      %c0_21 = arith.constant 0 : index
      %c0_22 = arith.constant 0 : index
      %42 = vector.load %arg18[%c0_21, %c0_22] : memref<1x1xf32, #tpu.memory_space<vmem>>, vector<1x1xf32>
      %c0_23 = arith.constant 0 : index
      %c0_24 = arith.constant 0 : index
      %43 = vector.load %arg3[%c0_23, %c0_24] : memref<64x39xf32, #tpu.memory_space<vmem>>, vector<64x39xf32>
      %cst_25 = arith.constant 0.000000e+00 : f32
      %44 = vector.broadcast %cst_25 : f32 to vector<64x39xf32>
      %45 = arith.maximumf %33, %44 : vector<64x39xf32>
      %46 = arith.mulf %33, %43 : vector<64x39xf32>
      %47 = arith.subf %45, %46 : vector<64x39xf32>
      %48 = math.absf %33 : vector<64x39xf32>
      %cst_26 = arith.constant 0.000000e+00 : f32
      %49 = vector.broadcast %cst_26 : f32 to vector<64x39xf32>
      %50 = arith.subf %49, %48 : vector<64x39xf32>
      %51 = math.exp %50 : vector<64x39xf32>
      %52 = math.log1p %51 : vector<64x39xf32>
      %53 = arith.addf %47, %52 : vector<64x39xf32>
      %cst_27 = arith.constant 0.000000e+00 : f32
      %54 = vector.shape_cast %41 : vector<64x1xi1> to vector<64x1xi1>
      %55 = vector.broadcast %54 : vector<64x1xi1> to vector<64x39xi1>
      %56 = vector.broadcast %cst_27 : f32 to vector<64x39xf32>
      %57 = arith.select %55, %53, %56 : vector<64x39xi1>, vector<64x39xf32>
      %cst_28 = arith.constant dense<0.000000e+00> : vector<64xf32>
      %58 = vector.multi_reduction <add>, %57, %cst_28 [1] : vector<64x39xf32> to vector<64xf32>
      %59 = vector.shape_cast %58 : vector<64xf32> to vector<64x1xf32>
      %cst_29 = arith.constant dense<0.000000e+00> : vector<1xf32>
      %60 = vector.multi_reduction <add>, %59, %cst_29 [0] : vector<64x1xf32> to vector<1xf32>
      %61 = vector.shape_cast %60 : vector<1xf32> to vector<1x1xf32>
      %62 = arith.addf %42, %61 : vector<1x1xf32>
      %c0_30 = arith.constant 0 : index
      %c0_31 = arith.constant 0 : index
      %63 = vector.load %arg18[%c0_30, %c0_31] : memref<1x1xf32, #tpu.memory_space<vmem>>, vector<1x1xf32>
      tpu.vector_store %arg18[%c0_30, %c0_31], %62 {strides = array<i32>} : memref<1x1xf32, #tpu.memory_space<vmem>>, vector<1x1xf32>,
      %c0_32 = arith.constant 0 : index
      %c0_33 = arith.constant 0 : index
      %64 = vector.load %arg19[%c0_32, %c0_33] : memref<1x1xf32, #tpu.memory_space<vmem>>, vector<1x1xf32>
      %c0_34 = arith.constant 0 : index
      %c0_35 = arith.constant 0 : index
      %65 = vector.load %arg4[%c0_34, %c0_35] : memref<64x1xf32, #tpu.memory_space<vmem>>, vector<64x1xf32>
      %cst_36 = arith.constant 0.000000e+00 : f32
      %66 = vector.broadcast %cst_36 : f32 to vector<64x1xf32>
      %67 = arith.maximumf %39, %66 : vector<64x1xf32>
      %68 = arith.mulf %39, %65 : vector<64x1xf32>
      %69 = arith.subf %67, %68 : vector<64x1xf32>
      %70 = math.absf %39 : vector<64x1xf32>
      %cst_37 = arith.constant 0.000000e+00 : f32
      %71 = vector.broadcast %cst_37 : f32 to vector<64x1xf32>
      %72 = arith.subf %71, %70 : vector<64x1xf32>
      %73 = math.exp %72 : vector<64x1xf32>
      %74 = math.log1p %73 : vector<64x1xf32>
      %75 = arith.addf %69, %74 : vector<64x1xf32>
      %cst_38 = arith.constant 0.000000e+00 : f32
      %76 = vector.broadcast %cst_38 : f32 to vector<64x1xf32>
      %77 = arith.select %41, %75, %76 : vector<64x1xi1>, vector<64x1xf32>
      %cst_39 = arith.constant dense<0.000000e+00> : vector<64xf32>
      %78 = vector.multi_reduction <add>, %77, %cst_39 [1] : vector<64x1xf32> to vector<64xf32>
      %79 = vector.shape_cast %78 : vector<64xf32> to vector<64x1xf32>
      %cst_40 = arith.constant dense<0.000000e+00> : vector<1xf32>
      %80 = vector.multi_reduction <add>, %79, %cst_40 [0] : vector<64x1xf32> to vector<1xf32>
      %81 = vector.shape_cast %80 : vector<1xf32> to vector<1x1xf32>
      %82 = arith.addf %64, %81 : vector<1x1xf32>
      %c0_41 = arith.constant 0 : index
      %c0_42 = arith.constant 0 : index
      %83 = vector.load %arg19[%c0_41, %c0_42] : memref<1x1xf32, #tpu.memory_space<vmem>>, vector<1x1xf32>
      tpu.vector_store %arg19[%c0_41, %c0_42], %82 {strides = array<i32>} : memref<1x1xf32, #tpu.memory_space<vmem>>, vector<1x1xf32>,
    } else {
    }
    %c300_i32 = arith.constant 300 : i32
    %12 = arith.cmpi slt, %5, %c300_i32 : i32
    %13 = arith.extui %12 : i1 to i32
    %c0_i32_2 = arith.constant 0 : i32
    %14 = arith.cmpi ne, %13, %c0_i32_2 : i32
    scf.if %14 {
      %c0 = arith.constant 0 : index
      %c0_4 = arith.constant 0 : index
      %18 = vector.load %arg5[%c0, %c0_4] : memref<64x32xf32, #tpu.memory_space<vmem>>, vector<64x32xf32>
      %19 = arith.truncf %18 : vector<64x32xf32> to vector<64x32xbf16>
      %c0_5 = arith.constant 0 : index
      %c0_6 = arith.constant 0 : index
      %20 = vector.load %arg13[%c0_5, %c0_6] : memref<32x32xbf16, #tpu.memory_space<vmem>>, vector<32x32xbf16>
      %cst = arith.constant dense<0.000000e+00> : vector<64x32xf32>
      %21 = tpu.matmul %19, %20, %cst {dimension_numbers = #tpu.dot_dimension_numbers<[1], [0], [0], [1], [0, 0, 1, 1], [], []>} : vector<64x32xbf16>, vector<32x32xbf16>, vector<64x32xf32> -> vector<64x32xf32>
      %c0_7 = arith.constant 0 : index
      %c0_8 = arith.constant 0 : index
      %22 = vector.load %arg14[%c0_7, %c0_8] : memref<1x32xf32, #tpu.memory_space<vmem>>, vector<1x32xf32>
      %23 = vector.broadcast %22 : vector<1x32xf32> to vector<64x32xf32>
      %24 = arith.addf %21, %23 : vector<64x32xf32>
      %cst_9 = arith.constant 0.000000e+00 : f32
      %25 = vector.broadcast %cst_9 : f32 to vector<64x32xf32>
      %26 = arith.maximumf %24, %25 : vector<64x32xf32>
      %27 = arith.truncf %26 : vector<64x32xf32> to vector<64x32xbf16>
      %c0_10 = arith.constant 0 : index
      %c0_11 = arith.constant 0 : index
      %28 = vector.load %arg15[%c0_10, %c0_11] : memref<32x1xbf16, #tpu.memory_space<vmem>>, vector<32x1xbf16>
      %cst_12 = arith.constant dense<0.000000e+00> : vector<64x1xf32>
      %29 = tpu.matmul %27, %28, %cst_12 {dimension_numbers = #tpu.dot_dimension_numbers<[1], [0], [0], [1], [0, 0, 1, 1], [], []>} : vector<64x32xbf16>, vector<32x1xbf16>, vector<64x1xf32> -> vector<64x1xf32>
      %c0_13 = arith.constant 0 : index
      %c0_14 = arith.constant 0 : index
      %30 = vector.load %arg16[%c0_13, %c0_14] : memref<1x1xf32, #tpu.memory_space<vmem>>, vector<1x1xf32>
      %31 = vector.broadcast %30 : vector<1x1xf32> to vector<64x1xf32>
      %32 = arith.addf %29, %31 : vector<64x1xf32>
      %c300_i32_15 = arith.constant 300 : i32
      %33 = vector.broadcast %c300_i32_15 : i32 to vector<64x1xi32>
      %34 = arith.cmpi slt, %8, %33 : vector<64x1xi32>
      %c0_16 = arith.constant 0 : index
      %c0_17 = arith.constant 0 : index
      %35 = vector.load %arg20[%c0_16, %c0_17] : memref<1x1xf32, #tpu.memory_space<vmem>>, vector<1x1xf32>
      %c0_18 = arith.constant 0 : index
      %c0_19 = arith.constant 0 : index
      %36 = vector.load %arg6[%c0_18, %c0_19] : memref<64x1xf32, #tpu.memory_space<vmem>>, vector<64x1xf32>
      %cst_20 = arith.constant 0.000000e+00 : f32
      %37 = vector.broadcast %cst_20 : f32 to vector<64x1xf32>
      %38 = arith.maximumf %32, %37 : vector<64x1xf32>
      %39 = arith.mulf %32, %36 : vector<64x1xf32>
      %40 = arith.subf %38, %39 : vector<64x1xf32>
      %41 = math.absf %32 : vector<64x1xf32>
      %cst_21 = arith.constant 0.000000e+00 : f32
      %42 = vector.broadcast %cst_21 : f32 to vector<64x1xf32>
      %43 = arith.subf %42, %41 : vector<64x1xf32>
      %44 = math.exp %43 : vector<64x1xf32>
      %45 = math.log1p %44 : vector<64x1xf32>
      %46 = arith.addf %40, %45 : vector<64x1xf32>
      %cst_22 = arith.constant 0.000000e+00 : f32
      %47 = vector.broadcast %cst_22 : f32 to vector<64x1xf32>
      %48 = arith.select %34, %46, %47 : vector<64x1xi1>, vector<64x1xf32>
      %cst_23 = arith.constant dense<0.000000e+00> : vector<64xf32>
      %49 = vector.multi_reduction <add>, %48, %cst_23 [1] : vector<64x1xf32> to vector<64xf32>
      %50 = vector.shape_cast %49 : vector<64xf32> to vector<64x1xf32>
      %cst_24 = arith.constant dense<0.000000e+00> : vector<1xf32>
      %51 = vector.multi_reduction <add>, %50, %cst_24 [0] : vector<64x1xf32> to vector<1xf32>
      %52 = vector.shape_cast %51 : vector<1xf32> to vector<1x1xf32>
      %53 = arith.addf %35, %52 : vector<1x1xf32>
      %c0_25 = arith.constant 0 : index
      %c0_26 = arith.constant 0 : index
      %54 = vector.load %arg20[%c0_25, %c0_26] : memref<1x1xf32, #tpu.memory_space<vmem>>, vector<1x1xf32>
      tpu.vector_store %arg20[%c0_25, %c0_26], %53 {strides = array<i32>} : memref<1x1xf32, #tpu.memory_space<vmem>>, vector<1x1xf32>,
    } else {
    }
    %c2_i32 = arith.constant 2 : i32
    %15 = arith.cmpi eq, %arg1, %c2_i32 : i32
    %16 = arith.extui %15 : i1 to i32
    %c0_i32_3 = arith.constant 0 : i32
    %17 = arith.cmpi ne, %16, %c0_i32_3 : i32
    scf.if %17 {
      %c0 = arith.constant 0 : index
      %c0_4 = arith.constant 0 : index
      %18 = vector.load %arg18[%c0, %c0_4] : memref<1x1xf32, #tpu.memory_space<vmem>>, vector<1x1xf32>
      %cst = arith.constant 1.28205123E-4 : f32
      %19 = vector.broadcast %cst : f32 to vector<1x1xf32>
      %20 = arith.mulf %18, %19 : vector<1x1xf32>
      %c0_5 = arith.constant 0 : index
      %c0_6 = arith.constant 0 : index
      %21 = vector.load %arg19[%c0_5, %c0_6] : memref<1x1xf32, #tpu.memory_space<vmem>>, vector<1x1xf32>
      %cst_7 = arith.constant 5.000000e-03 : f32
      %22 = vector.broadcast %cst_7 : f32 to vector<1x1xf32>
      %23 = arith.mulf %21, %22 : vector<1x1xf32>
      %c0_8 = arith.constant 0 : index
      %c0_9 = arith.constant 0 : index
      %24 = vector.load %arg20[%c0_8, %c0_9] : memref<1x1xf32, #tpu.memory_space<vmem>>, vector<1x1xf32>
      %cst_10 = arith.constant 0.00333333341 : f32
      %25 = vector.broadcast %cst_10 : f32 to vector<1x1xf32>
      %26 = arith.mulf %24, %25 : vector<1x1xf32>
      %27 = arith.addf %20, %26 : vector<1x1xf32>
      %28 = arith.addf %27, %23 : vector<1x1xf32>
      %29 = tpu.iota {dimensions = array<i32: 2>} : vector<1x8x128xi32>
      %c0_i32_11 = arith.constant 0 : i32
      %30 = vector.broadcast %c0_i32_11 : i32 to vector<1x8x128xi32>
      %31 = arith.cmpi eq, %29, %30 : vector<1x8x128xi32>
      %cst_12 = arith.constant 0.000000e+00 : f32
      %32 = vector.shape_cast %28 : vector<1x1xf32> to vector<1x1x1xf32>
      %33 = vector.broadcast %32 : vector<1x1x1xf32> to vector<1x8x128xf32>
      %34 = vector.broadcast %cst_12 : f32 to vector<1x8x128xf32>
      %35 = arith.select %31, %33, %34 : vector<1x8x128xi1>, vector<1x8x128xf32>
      %c1_i32 = arith.constant 1 : i32
      %36 = vector.broadcast %c1_i32 : i32 to vector<1x8x128xi32>
      %37 = arith.cmpi eq, %29, %36 : vector<1x8x128xi32>
      %cst_13 = arith.constant 0.000000e+00 : f32
      %38 = vector.shape_cast %20 : vector<1x1xf32> to vector<1x1x1xf32>
      %39 = vector.broadcast %38 : vector<1x1x1xf32> to vector<1x8x128xf32>
      %40 = vector.broadcast %cst_13 : f32 to vector<1x8x128xf32>
      %41 = arith.select %37, %39, %40 : vector<1x8x128xi1>, vector<1x8x128xf32>
      %42 = arith.addf %35, %41 : vector<1x8x128xf32>
      %c2_i32_14 = arith.constant 2 : i32
      %43 = vector.broadcast %c2_i32_14 : i32 to vector<1x8x128xi32>
      %44 = arith.cmpi eq, %29, %43 : vector<1x8x128xi32>
      %cst_15 = arith.constant 0.000000e+00 : f32
      %45 = vector.shape_cast %26 : vector<1x1xf32> to vector<1x1x1xf32>
      %46 = vector.broadcast %45 : vector<1x1x1xf32> to vector<1x8x128xf32>
      %47 = vector.broadcast %cst_15 : f32 to vector<1x8x128xf32>
      %48 = arith.select %44, %46, %47 : vector<1x8x128xi1>, vector<1x8x128xf32>
      %49 = arith.addf %42, %48 : vector<1x8x128xf32>
      %c3_i32_16 = arith.constant 3 : i32
      %50 = vector.broadcast %c3_i32_16 : i32 to vector<1x8x128xi32>
      %51 = arith.cmpi eq, %29, %50 : vector<1x8x128xi32>
      %cst_17 = arith.constant 0.000000e+00 : f32
      %52 = vector.shape_cast %23 : vector<1x1xf32> to vector<1x1x1xf32>
      %53 = vector.broadcast %52 : vector<1x1x1xf32> to vector<1x8x128xf32>
      %54 = vector.broadcast %cst_17 : f32 to vector<1x8x128xf32>
      %55 = arith.select %51, %53, %54 : vector<1x8x128xi1>, vector<1x8x128xf32>
      %56 = arith.addf %49, %55 : vector<1x8x128xf32>
      %c0_18 = arith.constant 0 : index
      %c0_19 = arith.constant 0 : index
      %c0_20 = arith.constant 0 : index
      %57 = vector.load %arg17[%c0_18, %c0_19, %c0_20] : memref<1x8x128xf32, #tpu.memory_space<vmem>>, vector<1x8x128xf32>
      tpu.vector_store %arg17[%c0_18, %c0_19, %c0_20], %56 {strides = array<i32>} : memref<1x8x128xf32, #tpu.memory_space<vmem>>, vector<1x8x128xf32>,
    } else {
    }
    return
  }
  func.func @transform_0(%arg0: i32, %arg1: i32) -> (i32, i32) {
    %c3_i32 = arith.constant 3 : i32
    %0 = arith.muli %arg0, %c3_i32 : i32
    %1 = arith.addi %0, %arg1 : i32
    %c3_i32_0 = arith.constant 3 : i32
    %2 = arith.minsi %1, %c3_i32_0 : i32
    %c0_i32 = arith.constant 0 : i32
    %c0_i32_1 = arith.constant 0 : i32
    return %2, %c0_i32 : i32, i32
  }
  func.func @transform_1(%arg0: i32, %arg1: i32) -> (i32, i32) {
    %c3_i32 = arith.constant 3 : i32
    %0 = arith.muli %arg0, %c3_i32 : i32
    %1 = arith.addi %0, %arg1 : i32
    %c3_i32_0 = arith.constant 3 : i32
    %2 = arith.minsi %1, %c3_i32_0 : i32
    %c0_i32 = arith.constant 0 : i32
    %c0_i32_1 = arith.constant 0 : i32
    return %2, %c0_i32 : i32, i32
  }
  func.func @transform_2(%arg0: i32, %arg1: i32) -> (i32, i32) {
    %c3_i32 = arith.constant 3 : i32
    %0 = arith.muli %arg0, %c3_i32 : i32
    %1 = arith.addi %0, %arg1 : i32
    %c3_i32_0 = arith.constant 3 : i32
    %2 = arith.minsi %1, %c3_i32_0 : i32
    %c0_i32 = arith.constant 0 : i32
    %c0_i32_1 = arith.constant 0 : i32
    return %2, %c0_i32 : i32, i32
  }
  func.func @transform_3(%arg0: i32, %arg1: i32) -> (i32, i32) {
    %c3_i32 = arith.constant 3 : i32
    %0 = arith.muli %arg0, %c3_i32 : i32
    %1 = arith.addi %0, %arg1 : i32
    %c4_i32 = arith.constant 4 : i32
    %2 = arith.minsi %1, %c4_i32 : i32
    %c0_i32 = arith.constant 0 : i32
    %c0_i32_0 = arith.constant 0 : i32
    return %2, %c0_i32 : i32, i32
  }
  func.func @transform_4(%arg0: i32, %arg1: i32) -> (i32, i32) {
    %c3_i32 = arith.constant 3 : i32
    %0 = arith.muli %arg0, %c3_i32 : i32
    %1 = arith.addi %0, %arg1 : i32
    %c4_i32 = arith.constant 4 : i32
    %2 = arith.minsi %1, %c4_i32 : i32
    %c0_i32 = arith.constant 0 : i32
    %c0_i32_0 = arith.constant 0 : i32
    return %2, %c0_i32 : i32, i32
  }
  func.func @transform_5(%arg0: i32, %arg1: i32) -> (i32, i32) {
    %c0_i32 = arith.constant 0 : i32
    %c0_i32_0 = arith.constant 0 : i32
    %c0_i32_1 = arith.constant 0 : i32
    return %c0_i32, %c0_i32_0 : i32, i32
  }
  func.func @transform_6(%arg0: i32, %arg1: i32) -> (i32, i32) {
    %c0_i32 = arith.constant 0 : i32
    %c0_i32_0 = arith.constant 0 : i32
    %c0_i32_1 = arith.constant 0 : i32
    return %c0_i32, %c0_i32_0 : i32, i32
  }
  func.func @transform_7(%arg0: i32, %arg1: i32) -> (i32, i32) {
    %c0_i32 = arith.constant 0 : i32
    %c0_i32_0 = arith.constant 0 : i32
    %c0_i32_1 = arith.constant 0 : i32
    return %c0_i32, %c0_i32_0 : i32, i32
  }
  func.func @transform_8(%arg0: i32, %arg1: i32) -> (i32, i32) {
    %c0_i32 = arith.constant 0 : i32
    %c0_i32_0 = arith.constant 0 : i32
    %c0_i32_1 = arith.constant 0 : i32
    return %c0_i32, %c0_i32_0 : i32, i32
  }
  func.func @transform_9(%arg0: i32, %arg1: i32) -> (i32, i32) {
    %c0_i32 = arith.constant 0 : i32
    %c0_i32_0 = arith.constant 0 : i32
    %c0_i32_1 = arith.constant 0 : i32
    return %c0_i32, %c0_i32_0 : i32, i32
  }
  func.func @transform_10(%arg0: i32, %arg1: i32) -> (i32, i32) {
    %c0_i32 = arith.constant 0 : i32
    %c0_i32_0 = arith.constant 0 : i32
    %c0_i32_1 = arith.constant 0 : i32
    return %c0_i32, %c0_i32_0 : i32, i32
  }
  func.func @transform_11(%arg0: i32, %arg1: i32) -> (i32, i32) {
    %c0_i32 = arith.constant 0 : i32
    %c0_i32_0 = arith.constant 0 : i32
    %c0_i32_1 = arith.constant 0 : i32
    return %c0_i32, %c0_i32_0 : i32, i32
  }
  func.func @transform_12(%arg0: i32, %arg1: i32) -> (i32, i32) {
    %c0_i32 = arith.constant 0 : i32
    %c0_i32_0 = arith.constant 0 : i32
    %c0_i32_1 = arith.constant 0 : i32
    return %c0_i32, %c0_i32_0 : i32, i32
  }
  func.func @transform_13(%arg0: i32, %arg1: i32) -> (i32, i32) {
    %c0_i32 = arith.constant 0 : i32
    %c0_i32_0 = arith.constant 0 : i32
    %c0_i32_1 = arith.constant 0 : i32
    return %c0_i32, %c0_i32_0 : i32, i32
  }
  func.func @transform_14(%arg0: i32, %arg1: i32) -> (i32, i32) {
    %c0_i32 = arith.constant 0 : i32
    %c0_i32_0 = arith.constant 0 : i32
    %c0_i32_1 = arith.constant 0 : i32
    return %c0_i32, %c0_i32_0 : i32, i32
  }
  func.func @transform_15(%arg0: i32, %arg1: i32) -> (i32, i32, i32) {
    %c0_i32 = arith.constant 0 : i32
    %c0_i32_0 = arith.constant 0 : i32
    %c0_i32_1 = arith.constant 0 : i32
    return %arg0, %c0_i32, %c0_i32_0 : i32, i32, i32
  }
}

</mosaic_0001>

<llo_original>
// kernel: comp_identify_forward.1
$region0: #{comp_identify_forward.1}
  #allocation0 [shape = 'u32[]', space=smem, size = 0x4, offset = 0x4, fixed_abs, tag = 'smem constant byte address 0x4 - core index']
  #allocation1 [shape = 'u32[144,128]{1,0:T(1,128)}', space=vmem, size = 0x12000, scoped, tag = 'internal scratch']
  #allocation2 [shape = 'f32[1,1]{1,0:T(1,128)}', space=vmem, size = 0x200, scoped, tag = 'scratch operand']
  #allocation3 [shape = 'f32[1,1]{1,0:T(1,128)}', space=vmem, size = 0x200, scoped, tag = 'scratch operand']
  #allocation4 [shape = 'f32[1,1]{1,0:T(1,128)}', space=vmem, size = 0x200, scoped, tag = 'scratch operand']
  #allocation5 [shape = 'f32[1,1]{1,0:T(1,128)S(1)}', space=vmem, size = 0x200, scoped, tag = 'scoped memory for comp_identify_forward.1']
  #allocation6 [shape = 'f32[1,1]{1,0:T(1,128)S(1)}', space=vmem, size = 0x200, scoped, tag = 'scoped memory for comp_identify_forward.1']
  %s0 = inlined_call_operand.vmem [shape: f32[200,32], index: 0, kind: input, shape index: {}]
  %s1 = inlined_call_operand.vmem [shape: f32[200,39], index: 1, kind: input, shape index: {}]
  %s2 = inlined_call_operand.vmem [shape: f32[200,1], index: 2, kind: input, shape index: {}]
  %s3 = inlined_call_operand.vmem [shape: f32[300,32], index: 3, kind: input, shape index: {}]
  %s4 = inlined_call_operand.vmem [shape: f32[300,1], index: 4, kind: input, shape index: {}]
  %s5 = inlined_call_operand.vmem [shape: bf16[32,64], index: 5, kind: input, shape index: {}]
  %s6 = inlined_call_operand.vmem [shape: f32[1,64], index: 6, kind: input, shape index: {}]
  %s7 = inlined_call_operand.vmem [shape: bf16[32,39], index: 7, kind: input, shape index: {}]
  %s8 = inlined_call_operand.vmem [shape: f32[1,39], index: 8, kind: input, shape index: {}]
  %s9 = inlined_call_operand.vmem [shape: bf16[32,1], index: 9, kind: input, shape index: {}]
  %s10 = inlined_call_operand.<no memory space> [shape: f32[1,1], index: 10, kind: input, shape index: {}]
  %s11 = inlined_call_operand.vmem [shape: bf16[32,32], index: 11, kind: input, shape index: {}]
  %s12 = inlined_call_operand.vmem [shape: f32[1,32], index: 12, kind: input, shape index: {}]
  %s13 = inlined_call_operand.vmem [shape: bf16[32,1], index: 13, kind: input, shape index: {}]
  %s14 = inlined_call_operand.<no memory space> [shape: f32[1,1], index: 14, kind: input, shape index: {}]
  %s15 = inlined_call_operand.vmem [shape: f32[2,8,128], index: 15, kind: output, shape index: {}]
  %s16 = sld [smem:[#allocation0]]
  $region109: #{comp_identify_forward.1} parent=0
    _
  %s18 = ssub.s32 1, %s16
  %s19 = scalar_select 0, %s18, %s16
  %v20 = vstv %s10
  %21 = vst [vmem:[#allocation5] sm:$0x1] %v20
  %v22 = vstv %s14
  %23 = vst [vmem:[#allocation6] sm:$0x1] %v22
  loop: start=0, step=1, limit=8
  $region2: #{comp_identify_forward.1} parent=0 // loop_pre_header
    _
  $region3: #{comp_identify_forward.1} parent=0 // loop_header
    %s25 = sphi 0, %s29
    %p26 = scmp.ge.s32.totalorder %s25, 8
    %s32 = sphi 0, %s44
    %s33 = sphi 0, %s40
    %s34 = sphi 0, %s32
    %s35 = sphi 0, %s33
    %s36 = sphi 0, %s34
    %s37 = sphi 0, %s35
    %s55 = sphi 0, %s57
    %s58 = sphi 0, %s55
    %s59 = sphi 0, %s58
    %s75 = sphi 0, %s59
    %s89 = sphi 0, %s91
    %s92 = sphi 0, %s89
    %s93 = sphi 0, %s92
    %s109 = sphi 0, %s93
    %s123 = sphi 0, %s125
    %s126 = sphi 0, %s123
    %s127 = sphi 0, %s126
    %s143 = sphi 0, %s127
    %s157 = sphi 0, %s159
    %s160 = sphi 0, %s157
    %s161 = sphi 0, %s160
    %s177 = sphi 0, %s161
    %s191 = sphi 0, %s193
    %s194 = sphi 0, %s191
    %s195 = sphi 0, %s194
    %s211 = sphi 0, %s195
    %s215 = sphi 0, %s215
    %s217 = sphi 0, %s215
    %s218 = sphi 0, %s217
    %s232 = sphi 0, %s218
    %s236 = sphi 0, %s236
    %s238 = sphi 0, %s236
    %s239 = sphi 0, %s238
    %s253 = sphi 0, %s239
    %s257 = sphi 0, %s257
    %s259 = sphi 0, %s257
    %s260 = sphi 0, %s259
    %s274 = sphi 0, %s260
    %s278 = sphi 0, %s278
    %s280 = sphi 0, %s278
    %s281 = sphi 0, %s280
    %s295 = sphi 0, %s281
    %s299 = sphi 0, %s299
    %s301 = sphi 0, %s299
    %s302 = sphi 0, %s301
    %s316 = sphi 0, %s302
    %s320 = sphi 0, %s320
    %s322 = sphi 0, %s320
    %s323 = sphi 0, %s322
    %s337 = sphi 0, %s323
    %s341 = sphi 0, %s341
    %s343 = sphi 0, %s341
    %s344 = sphi 0, %s343
    %s358 = sphi 0, %s344
    %s362 = sphi 0, %s362
    %s364 = sphi 0, %s362
    %s365 = sphi 0, %s364
    %s379 = sphi 0, %s365
    %s383 = sphi 0, %s383
    %s385 = sphi 0, %s383
    %s386 = sphi 0, %s385
    %s400 = sphi 0, %s386
    %s404 = sphi 0, %s404
    %s406 = sphi 0, %s404
    %s407 = sphi 0, %s406
    %s421 = sphi 0, %s407
    %s427 = sphi 0, %s429
    %s430 = sphi 0, %s427
    %s431 = sphi 0, %s430
    %s447 = sphi 0, %s431
  $region4: #{comp_identify_forward.1} parent=0 // loop_header_branch
    %28 = sbr.rel (%p26) target = $region8
  $region5: #{comp_identify_forward.1} parent=0 // loop_body
    %s30 = ssub.s32 %s25, 1
    %s31 = ssub.s32 %s25, 2
    %s38 = sadd.s32 1, %s33
    %p39 = scmp.ge.s32.totalorder %s38, 3
    %s40 = scalar_select %p39, 0, %s38
    %s41 = sadd.s32 1, %s32
    %s42 = scalar_select %p39, %s41, %s32
    %p43 = scmp.ge.s32.totalorder %s42, 2
    %s44 = scalar_select %p43, 0, %s42
    %s45 = smul.u32 %s32, 3
    %s46 = sadd.s32 %s45, %s33
    %p47 = scmp.lt.s32.totalorder %s46, 3
    %s48 = scalar_select %p47, %s46, 3
    %s49 = smul.u32 %s44, 3
    %s50 = sadd.s32 %s49, %s40
    %p51 = scmp.lt.s32.totalorder %s50, 3
    %s52 = scalar_select %p51, %s50, 3
    %s53 = ssub.s32 %s48, %s52
    %p54 = scmp.eq.s32.totalorder %s53, 0
    %s56 = sadd.s32 %s55, 1
    %s57 = scalar_select %p54, %s55, %s56
    %p60 = pneg %p54
    %p61 = scmp.eq.s32.totalorder %s25, 5
    %p62 = por %p60, %p61
    %p63 = scmp.ne.s32.totalorder %s55, %s58
    %p64 = scmp.eq.s32.totalorder %s25, 0
    %p65 = por %p63, %p64
    %p66 = scmp.ne.s32.totalorder %s55, %s58
    %p67 = scmp.eq.s32.totalorder %s30, 5
    %p68 = por %p66, %p67
    %p69 = scmp.ne.s32.totalorder %s58, %s59
    %p70 = scmp.eq.s32.totalorder %s30, 0
    %p71 = por %p69, %p70
    %p72 = scmp.ne.s32.totalorder %s58, %s59
    %p73 = scmp.eq.s32.totalorder %s31, 5
    %p74 = por %p72, %p73
    %p76 = scmp.ne.s32.totalorder %s59, %s75
    %p77 = scmp.eq.s32.totalorder %s31, 0
    %p78 = por %p76, %p77
    %s79 = smul.u32 %s32, 3
    %s80 = sadd.s32 %s79, %s33
    %p81 = scmp.lt.s32.totalorder %s80, 3
    %s82 = scalar_select %p81, %s80, 3
    %s83 = smul.u32 %s44, 3
    %s84 = sadd.s32 %s83, %s40
    %p85 = scmp.lt.s32.totalorder %s84, 3
    %s86 = scalar_select %p85, %s84, 3
    %s87 = ssub.s32 %s82, %s86
    %p88 = scmp.eq.s32.totalorder %s87, 0
    %s90 = sadd.s32 %s89, 1
    %s91 = scalar_select %p88, %s89, %s90
    %p94 = pneg %p88
    %p95 = scmp.eq.s32.totalorder %s25, 5
    %p96 = por %p94, %p95
    %p97 = scmp.ne.s32.totalorder %s89, %s92
    %p98 = scmp.eq.s32.totalorder %s25, 0
    %p99 = por %p97, %p98
    %p100 = scmp.ne.s32.totalorder %s89, %s92
    %p101 = scmp.eq.s32.totalorder %s30, 5
    %p102 = por %p100, %p101
    %p103 = scmp.ne.s32.totalorder %s92, %s93
    %p104 = scmp.eq.s32.totalorder %s30, 0
    %p105 = por %p103, %p104
    %p106 = scmp.ne.s32.totalorder %s92, %s93
    %p107 = scmp.eq.s32.totalorder %s31, 5
    %p108 = por %p106, %p107
    %p110 = scmp.ne.s32.totalorder %s93, %s109
    %p111 = scmp.eq.s32.totalorder %s31, 0
    %p112 = por %p110, %p111
    %s113 = smul.u32 %s32, 3
    %s114 = sadd.s32 %s113, %s33
    %p115 = scmp.lt.s32.totalorder %s114, 3
    %s116 = scalar_select %p115, %s114, 3
    %s117 = smul.u32 %s44, 3
    %s118 = sadd.s32 %s117, %s40
    %p119 = scmp.lt.s32.totalorder %s118, 3
    %s120 = scalar_select %p119, %s118, 3
    %s121 = ssub.s32 %s116, %s120
    %p122 = scmp.eq.s32.totalorder %s121, 0
    %s124 = sadd.s32 %s123, 1
    %s125 = scalar_select %p122, %s123, %s124
    %p128 = pneg %p122
    %p129 = scmp.eq.s32.totalorder %s25, 5
    %p130 = por %p128, %p129
    %p131 = scmp.ne.s32.totalorder %s123, %s126
    %p132 = scmp.eq.s32.totalorder %s25, 0
    %p133 = por %p131, %p132
    %p134 = scmp.ne.s32.totalorder %s123, %s126
    %p135 = scmp.eq.s32.totalorder %s30, 5
    %p136 = por %p134, %p135
    %p137 = scmp.ne.s32.totalorder %s126, %s127
    %p138 = scmp.eq.s32.totalorder %s30, 0
    %p139 = por %p137, %p138
    %p140 = scmp.ne.s32.totalorder %s126, %s127
    %p141 = scmp.eq.s32.totalorder %s31, 5
    %p142 = por %p140, %p141
    %p144 = scmp.ne.s32.totalorder %s127, %s143
    %p145 = scmp.eq.s32.totalorder %s31, 0
    %p146 = por %p144, %p145
    %s147 = smul.u32 %s32, 3
    %s148 = sadd.s32 %s147, %s33
    %p149 = scmp.lt.s32.totalorder %s148, 4
    %s150 = scalar_select %p149, %s148, 4
    %s151 = smul.u32 %s44, 3
    %s152 = sadd.s32 %s151, %s40
    %p153 = scmp.lt.s32.totalorder %s152, 4
    %s154 = scalar_select %p153, %s152, 4
    %s155 = ssub.s32 %s150, %s154
    %p156 = scmp.eq.s32.totalorder %s155, 0
    %s158 = sadd.s32 %s157, 1
    %s159 = scalar_select %p156, %s157, %s158
    %p162 = pneg %p156
    %p163 = scmp.eq.s32.totalorder %s25, 5
    %p164 = por %p162, %p163
    %p165 = scmp.ne.s32.totalorder %s157, %s160
    %p166 = scmp.eq.s32.totalorder %s25, 0
    %p167 = por %p165, %p166
    %p168 = scmp.ne.s32.totalorder %s157, %s160
    %p169 = scmp.eq.s32.totalorder %s30, 5
    %p170 = por %p168, %p169
    %p171 = scmp.ne.s32.totalorder %s160, %s161
    %p172 = scmp.eq.s32.totalorder %s30, 0
    %p173 = por %p171, %p172
    %p174 = scmp.ne.s32.totalorder %s160, %s161
    %p175 = scmp.eq.s32.totalorder %s31, 5
    %p176 = por %p174, %p175
    %p178 = scmp.ne.s32.totalorder %s161, %s177
    %p179 = scmp.eq.s32.totalorder %s31, 0
    %p180 = por %p178, %p179
    %s181 = smul.u32 %s32, 3
    %s182 = sadd.s32 %s181, %s33
    %p183 = scmp.lt.s32.totalorder %s182, 4
    %s184 = scalar_select %p183, %s182, 4
    %s185 = smul.u32 %s44, 3
    %s186 = sadd.s32 %s185, %s40
    %p187 = scmp.lt.s32.totalorder %s186, 4
    %s188 = scalar_select %p187, %s186, 4
    %s189 = ssub.s32 %s184, %s188
    %p190 = scmp.eq.s32.totalorder %s189, 0
    %s192 = sadd.s32 %s191, 1
    %s193 = scalar_select %p190, %s191, %s192
    %p196 = pneg %p190
    %p197 = scmp.eq.s32.totalorder %s25, 5
    %p198 = por %p196, %p197
    %p199 = scmp.ne.s32.totalorder %s191, %s194
    %p200 = scmp.eq.s32.totalorder %s25, 0
    %p201 = por %p199, %p200
    %p202 = scmp.ne.s32.totalorder %s191, %s194
    %p203 = scmp.eq.s32.totalorder %s30, 5
    %p204 = por %p202, %p203
    %p205 = scmp.ne.s32.totalorder %s194, %s195
    %p206 = scmp.eq.s32.totalorder %s30, 0
    %p207 = por %p205, %p206
    %p208 = scmp.ne.s32.totalorder %s194, %s195
    %p209 = scmp.eq.s32.totalorder %s31, 5
    %p210 = por %p208, %p209
    %p212 = scmp.ne.s32.totalorder %s195, %s211
    %p213 = scmp.eq.s32.totalorder %s31, 0
    %p214 = por %p212, %p213
    %s216 = sadd.s32 %s215, 1
    %p219 = scmp.eq.s32.totalorder %s25, 5
    %p220 = scmp.ne.s32.totalorder %s215, %s217
    %p221 = scmp.eq.s32.totalorder %s25, 0
    %p222 = por %p220, %p221
    %p223 = scmp.ne.s32.totalorder %s215, %s217
    %p224 = scmp.eq.s32.totalorder %s30, 5
    %p225 = por %p223, %p224
    %p226 = scmp.ne.s32.totalorder %s217, %s218
    %p227 = scmp.eq.s32.totalorder %s30, 0
    %p228 = por %p226, %p227
    %p229 = scmp.ne.s32.totalorder %s217, %s218
    %p230 = scmp.eq.s32.totalorder %s31, 5
    %p231 = por %p229, %p230
    %p233 = scmp.ne.s32.totalorder %s218, %s232
    %p234 = scmp.eq.s32.totalorder %s31, 0
    %p235 = por %p233, %p234
    %s237 = sadd.s32 %s236, 1
    %p240 = scmp.eq.s32.totalorder %s25, 5
    %p241 = scmp.ne.s32.totalorder %s236, %s238
    %p242 = scmp.eq.s32.totalorder %s25, 0
    %p243 = por %p241, %p242
    %p244 = scmp.ne.s32.totalorder %s236, %s238
    %p245 = scmp.eq.s32.totalorder %s30, 5
    %p246 = por %p244, %p245
    %p247 = scmp.ne.s32.totalorder %s238, %s239
    %p248 = scmp.eq.s32.totalorder %s30, 0
    %p249 = por %p247, %p248
    %p250 = scmp.ne.s32.totalorder %s238, %s239
    %p251 = scmp.eq.s32.totalorder %s31, 5
    %p252 = por %p250, %p251
    %p254 = scmp.ne.s32.totalorder %s239, %s253
    %p255 = scmp.eq.s32.totalorder %s31, 0
    %p256 = por %p254, %p255
    %s258 = sadd.s32 %s257, 1
    %p261 = scmp.eq.s32.totalorder %s25, 5
    %p262 = scmp.ne.s32.totalorder %s257, %s259
    %p263 = scmp.eq.s32.totalorder %s25, 0
    %p264 = por %p262, %p263
    %p265 = scmp.ne.s32.totalorder %s257, %s259
    %p266 = scmp.eq.s32.totalorder %s30, 5
    %p267 = por %p265, %p266
    %p268 = scmp.ne.s32.totalorder %s259, %s260
    %p269 = scmp.eq.s32.totalorder %s30, 0
    %p270 = por %p268, %p269
    %p271 = scmp.ne.s32.totalorder %s259, %s260
    %p272 = scmp.eq.s32.totalorder %s31, 5
    %p273 = por %p271, %p272
    %p275 = scmp.ne.s32.totalorder %s260, %s274
    %p276 = scmp.eq.s32.totalorder %s31, 0
    %p277 = por %p275, %p276
    %s279 = sadd.s32 %s278, 1
    %p282 = scmp.eq.s32.totalorder %s25, 5
    %p283 = scmp.ne.s32.totalorder %s278, %s280
    %p284 = scmp.eq.s32.totalorder %s25, 0
    %p285 = por %p283, %p284
    %p286 = scmp.ne.s32.totalorder %s278, %s280
    %p287 = scmp.eq.s32.totalorder %s30, 5
    %p288 = por %p286, %p287
    %p289 = scmp.ne.s32.totalorder %s280, %s281
    %p290 = scmp.eq.s32.totalorder %s30, 0
    %p291 = por %p289, %p290
    %p292 = scmp.ne.s32.totalorder %s280, %s281
    %p293 = scmp.eq.s32.totalorder %s31, 5
    %p294 = por %p292, %p293
    %p296 = scmp.ne.s32.totalorder %s281, %s295
    %p297 = scmp.eq.s32.totalorder %s31, 0
    %p298 = por %p296, %p297
    %s300 = sadd.s32 %s299, 1
    %p303 = scmp.eq.s32.totalorder %s25, 5
    %p304 = scmp.ne.s32.totalorder %s299, %s301
    %p305 = scmp.eq.s32.totalorder %s25, 0
    %p306 = por %p304, %p305
    %p307 = scmp.ne.s32.totalorder %s299, %s301
    %p308 = scmp.eq.s32.totalorder %s30, 5
    %p309 = por %p307, %p308
    %p310 = scmp.ne.s32.totalorder %s301, %s302
    %p311 = scmp.eq.s32.totalorder %s30, 0
    %p312 = por %p310, %p311
    %p313 = scmp.ne.s32.totalorder %s301, %s302
    %p314 = scmp.eq.s32.totalorder %s31, 5
    %p315 = por %p313, %p314
    %p317 = scmp.ne.s32.totalorder %s302, %s316
    %p318 = scmp.eq.s32.totalorder %s31, 0
    %p319 = por %p317, %p318
    %s321 = sadd.s32 %s320, 1
    %p324 = scmp.eq.s32.totalorder %s25, 5
    %p325 = scmp.ne.s32.totalorder %s320, %s322
    %p326 = scmp.eq.s32.totalorder %s25, 0
    %p327 = por %p325, %p326
    %p328 = scmp.ne.s32.totalorder %s320, %s322
    %p329 = scmp.eq.s32.totalorder %s30, 5
    %p330 = por %p328, %p329
    %p331 = scmp.ne.s32.totalorder %s322, %s323
    %p332 = scmp.eq.s32.totalorder %s30, 0
    %p333 = por %p331, %p332
    %p334 = scmp.ne.s32.totalorder %s322, %s323
    %p335 = scmp.eq.s32.totalorder %s31, 5
    %p336 = por %p334, %p335
    %p338 = scmp.ne.s32.totalorder %s323, %s337
    %p339 = scmp.eq.s32.totalorder %s31, 0
    %p340 = por %p338, %p339
    %s342 = sadd.s32 %s341, 1
    %p345 = scmp.eq.s32.totalorder %s25, 5
    %p346 = scmp.ne.s32.totalorder %s341, %s343
    %p347 = scmp.eq.s32.totalorder %s25, 0
    %p348 = por %p346, %p347
    %p349 = scmp.ne.s32.totalorder %s341, %s343
    %p350 = scmp.eq.s32.totalorder %s30, 5
    %p351 = por %p349, %p350
    %p352 = scmp.ne.s32.totalorder %s343, %s344
    %p353 = scmp.eq.s32.totalorder %s30, 0
    %p354 = por %p352, %p353
    %p355 = scmp.ne.s32.totalorder %s343, %s344
    %p356 = scmp.eq.s32.totalorder %s31, 5
    %p357 = por %p355, %p356
    %p359 = scmp.ne.s32.totalorder %s344, %s358
    %p360 = scmp.eq.s32.totalorder %s31, 0
    %p361 = por %p359, %p360
    %s363 = sadd.s32 %s362, 1
    %p366 = scmp.eq.s32.totalorder %s25, 5
    %p367 = scmp.ne.s32.totalorder %s362, %s364
    %p368 = scmp.eq.s32.totalorder %s25, 0
    %p369 = por %p367, %p368
    %p370 = scmp.ne.s32.totalorder %s362, %s364
    %p371 = scmp.eq.s32.totalorder %s30, 5
    %p372 = por %p370, %p371
    %p373 = scmp.ne.s32.totalorder %s364, %s365
    %p374 = scmp.eq.s32.totalorder %s30, 0
    %p375 = por %p373, %p374
    %p376 = scmp.ne.s32.totalorder %s364, %s365
    %p377 = scmp.eq.s32.totalorder %s31, 5
    %p378 = por %p376, %p377
    %p380 = scmp.ne.s32.totalorder %s365, %s379
    %p381 = scmp.eq.s32.totalorder %s31, 0
    %p382 = por %p380, %p381
    %s384 = sadd.s32 %s383, 1
    %p387 = scmp.eq.s32.totalorder %s25, 5
    %p388 = scmp.ne.s32.totalorder %s383, %s385
    %p389 = scmp.eq.s32.totalorder %s25, 0
    %p390 = por %p388, %p389
    %p391 = scmp.ne.s32.totalorder %s383, %s385
    %p392 = scmp.eq.s32.totalorder %s30, 5
    %p393 = por %p391, %p392
    %p394 = scmp.ne.s32.totalorder %s385, %s386
    %p395 = scmp.eq.s32.totalorder %s30, 0
    %p396 = por %p394, %p395
    %p397 = scmp.ne.s32.totalorder %s385, %s386
    %p398 = scmp.eq.s32.totalorder %s31, 5
    %p399 = por %p397, %p398
    %p401 = scmp.ne.s32.totalorder %s386, %s400
    %p402 = scmp.eq.s32.totalorder %s31, 0
    %p403 = por %p401, %p402
    %s405 = sadd.s32 %s404, 1
    %p408 = scmp.eq.s32.totalorder %s25, 5
    %p409 = scmp.ne.s32.totalorder %s404, %s406
    %p410 = scmp.eq.s32.totalorder %s25, 0
    %p411 = por %p409, %p410
    %p412 = scmp.ne.s32.totalorder %s404, %s406
    %p413 = scmp.eq.s32.totalorder %s30, 5
    %p414 = por %p412, %p413
    %p415 = scmp.ne.s32.totalorder %s406, %s407
    %p416 = scmp.eq.s32.totalorder %s30, 0
    %p417 = por %p415, %p416
    %p418 = scmp.ne.s32.totalorder %s406, %s407
    %p419 = scmp.eq.s32.totalorder %s31, 5
    %p420 = por %p418, %p419
    %p422 = scmp.ne.s32.totalorder %s407, %s421
    %p423 = scmp.eq.s32.totalorder %s31, 0
    %p424 = por %p422, %p423
    %s425 = ssub.s32 %s32, %s44
    %p426 = scmp.eq.s32.totalorder %s425, 0
    %s428 = sadd.s32 %s427, 1
    %s429 = scalar_select %p426, %s427, %s428
    %p432 = pneg %p426
    %p433 = scmp.eq.s32.totalorder %s25, 5
    %p434 = por %p432, %p433
    %p435 = scmp.ne.s32.totalorder %s427, %s430
    %p436 = scmp.eq.s32.totalorder %s25, 0
    %p437 = por %p435, %p436
    %p438 = scmp.ne.s32.totalorder %s427, %s430
    %p439 = scmp.eq.s32.totalorder %s30, 5
    %p440 = por %p438, %p439
    %p441 = scmp.ne.s32.totalorder %s430, %s431
    %p442 = scmp.eq.s32.totalorder %s30, 0
    %p443 = por %p441, %p442
    %p444 = scmp.ne.s32.totalorder %s430, %s431
    %p445 = scmp.eq.s32.totalorder %s31, 5
    %p446 = por %p444, %p445
    %p448 = scmp.ne.s32.totalorder %s431, %s447
    %p449 = scmp.eq.s32.totalorder %s31, 0
    %p450 = por %p448, %p449
    %p451 = scmp.le.s32.totalorder 1, %s25
    %p452 = scmp.lt.s32.totalorder %s25, 7
    %p453 = pnand %p451, %p452
    %p454 = pneg %p453
    // Predicated region
    $region9: #{comp_identify_forward.1} parent=5 // pred_check
      _
    $region10: #{comp_identify_forward.1} parent=5 // pred_check_branch
      %456 = sbr.rel (%p453) target = $region12
    $region11: #{comp_identify_forward.1} parent=5 // pred_region
      %s457 = ssub.s32 %s25, 1
      // Predicated region
      $region13: #{comp_identify_forward.1} parent=11 // pred_check
        %p458 = pneg %p228
      $region14: #{comp_identify_forward.1} parent=11 // pred_check_branch
        %460 = sbr.rel (%p458) target = $region16
      $region15: #{comp_identify_forward.1} parent=11 // pred_region
        _
      $region16: #{comp_identify_forward.1} parent=11 // pred_fallthru
        _
      // Predicated region
      $region17: #{comp_identify_forward.1} parent=11 // pred_check
        %p461 = pneg %p249
      $region18: #{comp_identify_forward.1} parent=11 // pred_check_branch
        %463 = sbr.rel (%p461) target = $region20
      $region19: #{comp_identify_forward.1} parent=11 // pred_region
        _
      $region20: #{comp_identify_forward.1} parent=11 // pred_fallthru
        _
      // Predicated region
      $region21: #{comp_identify_forward.1} parent=11 // pred_check
        %p464 = pneg %p270
      $region22: #{comp_identify_forward.1} parent=11 // pred_check_branch
        %466 = sbr.rel (%p464) target = $region24
      $region23: #{comp_identify_forward.1} parent=11 // pred_region
        _
      $region24: #{comp_identify_forward.1} parent=11 // pred_fallthru
        _
      // Predicated region
      $region25: #{comp_identify_forward.1} parent=11 // pred_check
        %p467 = pneg %p291
      $region26: #{comp_identify_forward.1} parent=11 // pred_check_branch
        %469 = sbr.rel (%p467) target = $region28
      $region27: #{comp_identify_forward.1} parent=11 // pred_region
        _
      $region28: #{comp_identify_forward.1} parent=11 // pred_fallthru
        _
      // Predicated region
      $region29: #{comp_identify_forward.1} parent=11 // pred_check
        %p470 = pneg %p312
      $region30: #{comp_identify_forward.1} parent=11 // pred_check_branch
        %472 = sbr.rel (%p470) target = $region32
      $region31: #{comp_identify_forward.1} parent=11 // pred_region
        _
      $region32: #{comp_identify_forward.1} parent=11 // pred_fallthru
        _
      // Predicated region
      $region33: #{comp_identify_forward.1} parent=11 // pred_check
        %p473 = pneg %p333
      $region34: #{comp_identify_forward.1} parent=11 // pred_check_branch
        %475 = sbr.rel (%p473) target = $region36
      $region35: #{comp_identify_forward.1} parent=11 // pred_region
        _
      $region36: #{comp_identify_forward.1} parent=11 // pred_fallthru
        _
      // Predicated region
      $region37: #{comp_identify_forward.1} parent=11 // pred_check
        %p476 = pneg %p354
      $region38: #{comp_identify_forward.1} parent=11 // pred_check_branch
        %478 = sbr.rel (%p476) target = $region40
      $region39: #{comp_identify_forward.1} parent=11 // pred_region
        _
      $region40: #{comp_identify_forward.1} parent=11 // pred_fallthru
        _
      // Predicated region
      $region41: #{comp_identify_forward.1} parent=11 // pred_check
        %p479 = pneg %p375
      $region42: #{comp_identify_forward.1} parent=11 // pred_check_branch
        %481 = sbr.rel (%p479) target = $region44
      $region43: #{comp_identify_forward.1} parent=11 // pred_region
        _
      $region44: #{comp_identify_forward.1} parent=11 // pred_fallthru
        _
      // Predicated region
      $region45: #{comp_identify_forward.1} parent=11 // pred_check
        %p482 = pneg %p396
      $region46: #{comp_identify_forward.1} parent=11 // pred_check_branch
        %484 = sbr.rel (%p482) target = $region48
      $region47: #{comp_identify_forward.1} parent=11 // pred_region
        _
      $region48: #{comp_identify_forward.1} parent=11 // pred_fallthru
        _
      // Predicated region
      $region49: #{comp_identify_forward.1} parent=11 // pred_check
        %p485 = pneg %p417
      $region50: #{comp_identify_forward.1} parent=11 // pred_check_branch
        %487 = sbr.rel (%p485) target = $region52
      $region51: #{comp_identify_forward.1} parent=11 // pred_region
        _
      $region52: #{comp_identify_forward.1} parent=11 // pred_fallthru
        _
    $region12: #{comp_identify_forward.1} parent=5 // pred_fallthru
      _
    %p488 = scmp.lt.s32.totalorder %s25, 6
    // Predicated region
    $region53: #{comp_identify_forward.1} parent=5 // pred_check
      %p489 = pneg %p488
    $region54: #{comp_identify_forward.1} parent=5 // pred_check_branch
      %491 = sbr.rel (%p489) target = $region56
    $region55: #{comp_identify_forward.1} parent=5 // pred_region
      // Predicated region
      $region57: #{comp_identify_forward.1} parent=55 // pred_check
        %p492 = pneg %p65
      $region58: #{comp_identify_forward.1} parent=55 // pred_check_branch
        %494 = sbr.rel (%p492) target = $region60
      $region59: #{comp_identify_forward.1} parent=55 // pred_region
        %s495 = smul.u32 %s32, 3
        %s496 = sadd.s32 %s495, %s33
        %p497 = scmp.lt.s32.totalorder %s496, 3
        %s498 = scalar_select %p497, %s496, 3
        %s499 = smul.u32 8, %s498
        %s500 = ssub.s32 25, %s499
        %p501 = scmp.lt.s32.totalorder %s500, 8
        %s502 = scalar_select %p501, %s500, 8
        %s503 = smul.u32 128, %s502
        %p504 = scmp.lt.s32.totalorder %s499, 24
        %s505 = scalar_select %p504, %s499, 24
        %s506 = smul.addr %s505, 8
        %s507 = scalar_lea.vmem %s0, %s506
        %s508 = smul.u32 %s32, 3
        %s509 = sadd.s32 %s508, %s33
        %p510 = scmp.lt.s32.totalorder %s509, 3
        %s511 = scalar_select %p510, %s509, 3
        %s512 = smul.u32 8, %s511
        %s513 = ssub.s32 25, %s512
        %p514 = scmp.lt.s32.totalorder %s513, 8
        %s515 = scalar_select %p514, %s513, 8
        %s516 = smul.u32 128, %s515
      $region60: #{comp_identify_forward.1} parent=55 // pred_fallthru
        _
      // Predicated region
      $region61: #{comp_identify_forward.1} parent=55 // pred_check
        %p517 = pneg %p99
      $region62: #{comp_identify_forward.1} parent=55 // pred_check_branch
        %519 = sbr.rel (%p517) target = $region64
      $region63: #{comp_identify_forward.1} parent=55 // pred_region
        %s520 = smul.u32 %s32, 3
        %s521 = sadd.s32 %s520, %s33
        %p522 = scmp.lt.s32.totalorder %s521, 3
        %s523 = scalar_select %p522, %s521, 3
        %s524 = smul.u32 8, %s523
        %s525 = ssub.s32 25, %s524
        %p526 = scmp.lt.s32.totalorder %s525, 8
        %s527 = scalar_select %p526, %s525, 8
        %s528 = smul.u32 128, %s527
        %p529 = scmp.lt.s32.totalorder %s524, 24
        %s530 = scalar_select %p529, %s524, 24
        %s531 = smul.addr %s530, 8
        %s532 = scalar_lea.vmem %s1, %s531
        %s533 = smul.u32 %s32, 3
        %s534 = sadd.s32 %s533, %s33
        %p535 = scmp.lt.s32.totalorder %s534, 3
        %s536 = scalar_select %p535, %s534, 3
        %s537 = smul.u32 8, %s536
        %s538 = ssub.s32 25, %s537
        %p539 = scmp.lt.s32.totalorder %s538, 8
        %s540 = scalar_select %p539, %s538, 8
        %s541 = smul.u32 128, %s540
      $region64: #{comp_identify_forward.1} parent=55 // pred_fallthru
        _
      // Predicated region
      $region65: #{comp_identify_forward.1} parent=55 // pred_check
        %p542 = pneg %p133
      $region66: #{comp_identify_forward.1} parent=55 // pred_check_branch
        %544 = sbr.rel (%p542) target = $region68
      $region67: #{comp_identify_forward.1} parent=55 // pred_region
        %s545 = smul.u32 %s32, 3
        %s546 = sadd.s32 %s545, %s33
        %p547 = scmp.lt.s32.totalorder %s546, 3
        %s548 = scalar_select %p547, %s546, 3
        %s549 = smul.u32 8, %s548
        %s550 = ssub.s32 25, %s549
        %p551 = scmp.lt.s32.totalorder %s550, 8
        %s552 = scalar_select %p551, %s550, 8
        %s553 = smul.u32 128, %s552
        %p554 = scmp.lt.s32.totalorder %s549, 24
        %s555 = scalar_select %p554, %s549, 24
        %s556 = smul.addr %s555, 8
        %s557 = scalar_lea.vmem %s2, %s556
        %s558 = smul.u32 %s32, 3
        %s559 = sadd.s32 %s558, %s33
        %p560 = scmp.lt.s32.totalorder %s559, 3
        %s561 = scalar_select %p560, %s559, 3
        %s562 = smul.u32 8, %s561
        %s563 = ssub.s32 25, %s562
        %p564 = scmp.lt.s32.totalorder %s563, 8
        %s565 = scalar_select %p564, %s563, 8
        %s566 = smul.u32 128, %s565
      $region68: #{comp_identify_forward.1} parent=55 // pred_fallthru
        _
      // Predicated region
      $region69: #{comp_identify_forward.1} parent=55 // pred_check
        %p567 = pneg %p167
      $region70: #{comp_identify_forward.1} parent=55 // pred_check_branch
        %569 = sbr.rel (%p567) target = $region72
      $region71: #{comp_identify_forward.1} parent=55 // pred_region
        %s570 = smul.u32 %s32, 3
        %s571 = sadd.s32 %s570, %s33
        %p572 = scmp.lt.s32.totalorder %s571, 4
        %s573 = scalar_select %p572, %s571, 4
        %s574 = smul.u32 8, %s573
        %s575 = ssub.s32 38, %s574
        %p576 = scmp.lt.s32.totalorder %s575, 8
        %s577 = scalar_select %p576, %s575, 8
        %s578 = smul.u32 128, %s577
        %p579 = scmp.lt.s32.totalorder %s574, 37
        %s580 = scalar_select %p579, %s574, 37
        %s581 = smul.addr %s580, 8
        %s582 = scalar_lea.vmem %s3, %s581
        %s583 = smul.u32 %s32, 3
        %s584 = sadd.s32 %s583, %s33
        %p585 = scmp.lt.s32.totalorder %s584, 4
        %s586 = scalar_select %p585, %s584, 4
        %s587 = smul.u32 8, %s586
        %s588 = ssub.s32 38, %s587
        %p589 = scmp.lt.s32.totalorder %s588, 8
        %s590 = scalar_select %p589, %s588, 8
        %s591 = smul.u32 128, %s590
      $region72: #{comp_identify_forward.1} parent=55 // pred_fallthru
        _
      // Predicated region
      $region73: #{comp_identify_forward.1} parent=55 // pred_check
        %p592 = pneg %p201
      $region74: #{comp_identify_forward.1} parent=55 // pred_check_branch
        %594 = sbr.rel (%p592) target = $region76
      $region75: #{comp_identify_forward.1} parent=55 // pred_region
        %s595 = smul.u32 %s32, 3
        %s596 = sadd.s32 %s595, %s33
        %p597 = scmp.lt.s32.totalorder %s596, 4
        %s598 = scalar_select %p597, %s596, 4
        %s599 = smul.u32 8, %s598
        %s600 = ssub.s32 38, %s599
        %p601 = scmp.lt.s32.totalorder %s600, 8
        %s602 = scalar_select %p601, %s600, 8
        %s603 = smul.u32 128, %s602
        %p604 = scmp.lt.s32.totalorder %s599, 37
        %s605 = scalar_select %p604, %s599, 37
        %s606 = smul.addr %s605, 8
        %s607 = scalar_lea.vmem %s4, %s606
        %s608 = smul.u32 %s32, 3
        %s609 = sadd.s32 %s608, %s33
        %p610 = scmp.lt.s32.totalorder %s609, 4
        %s611 = scalar_select %p610, %s609, 4
        %s612 = smul.u32 8, %s611
        %s613 = ssub.s32 38, %s612
        %p614 = scmp.lt.s32.totalorder %s613, 8
        %s615 = scalar_select %p614, %s613, 8
        %s616 = smul.u32 128, %s615
      $region76: #{comp_identify_forward.1} parent=55 // pred_fallthru
        _
    $region56: #{comp_identify_forward.1} parent=5 // pred_fallthru
      _
    %p617 = scmp.le.s32.totalorder 1, %s25
    %p618 = scmp.lt.s32.totalorder %s25, 7
    %p619 = pnand %p617, %p618
    %p620 = pneg %p619
    // Predicated region
    $region77: #{comp_identify_forward.1} parent=5 // pred_check
      _
    $region78: #{comp_identify_forward.1} parent=5 // pred_check_branch
      %622 = sbr.rel (%p619) target = $region80
    $region79: #{comp_identify_forward.1} parent=5 // pred_region
      %s623 = ssub.s32 %s25, 1
      %s624 = smul.u32 %s34, 3
      %s625 = sadd.s32 %s624, %s35
      %p626 = scmp.lt.s32.totalorder %s625, 3
      %s627 = scalar_select %p626, %s625, 3
      %s628 = smul.u32 8, %s627
      %s629 = ssub.s32 25, %s628
      %p630 = scmp.lt.s32.totalorder %s629, 8
      %s631 = scalar_select %p630, %s629, 8
      %s632 = smul.u32 128, %s631
      %p633 = scmp.lt.s32.totalorder %s628, 24
      %s634 = scalar_select %p633, %s628, 24
      %s635 = smul.addr %s634, 8
      %s636 = scalar_lea.vmem %s0, %s635
      %p637 = pneg %p71
      %p638 = pneg %p68
      %s639 = smul.u32 %s34, 3
      %s640 = sadd.s32 %s639, %s35
      %p641 = scmp.lt.s32.totalorder %s640, 3
      %s642 = scalar_select %p641, %s640, 3
      %s643 = smul.u32 8, %s642
      %s644 = ssub.s32 25, %s643
      %p645 = scmp.lt.s32.totalorder %s644, 8
      %s646 = scalar_select %p645, %s644, 8
      %s647 = smul.u32 128, %s646
      %p648 = scmp.lt.s32.totalorder %s643, 24
      %s649 = scalar_select %p648, %s643, 24
      %s650 = smul.addr %s649, 8
      %s651 = scalar_lea.vmem %s1, %s650
      %p652 = pneg %p105
      %p653 = pneg %p102
      %s654 = smul.u32 %s34, 3
      %s655 = sadd.s32 %s654, %s35
      %p656 = scmp.lt.s32.totalorder %s655, 3
      %s657 = scalar_select %p656, %s655, 3
      %s658 = smul.u32 8, %s657
      %s659 = ssub.s32 25, %s658
      %p660 = scmp.lt.s32.totalorder %s659, 8
      %s661 = scalar_select %p660, %s659, 8
      %s662 = smul.u32 128, %s661
      %p663 = scmp.lt.s32.totalorder %s658, 24
      %s664 = scalar_select %p663, %s658, 24
      %s665 = smul.addr %s664, 8
      %s666 = scalar_lea.vmem %s2, %s665
      %p667 = pneg %p139
      %p668 = pneg %p136
      %s669 = smul.u32 %s34, 3
      %s670 = sadd.s32 %s669, %s35
      %p671 = scmp.lt.s32.totalorder %s670, 4
      %s672 = scalar_select %p671, %s670, 4
      %s673 = smul.u32 8, %s672
      %s674 = ssub.s32 38, %s673
      %p675 = scmp.lt.s32.totalorder %s674, 8
      %s676 = scalar_select %p675, %s674, 8
      %s677 = smul.u32 128, %s676
      %p678 = scmp.lt.s32.totalorder %s673, 37
      %s679 = scalar_select %p678, %s673, 37
      %s680 = smul.addr %s679, 8
      %s681 = scalar_lea.vmem %s3, %s680
      %p682 = pneg %p173
      %p683 = pneg %p170
      %s684 = smul.u32 %s34, 3
      %s685 = sadd.s32 %s684, %s35
      %p686 = scmp.lt.s32.totalorder %s685, 4
      %s687 = scalar_select %p686, %s685, 4
      %s688 = smul.u32 8, %s687
      %s689 = ssub.s32 38, %s688
      %p690 = scmp.lt.s32.totalorder %s689, 8
      %s691 = scalar_select %p690, %s689, 8
      %s692 = smul.u32 128, %s691
      %p693 = scmp.lt.s32.totalorder %s688, 37
      %s694 = scalar_select %p693, %s688, 37
      %s695 = smul.addr %s694, 8
      %s696 = scalar_lea.vmem %s4, %s695
      %p697 = pneg %p207
      %p698 = pneg %p204
      %p699 = pneg %p228
      %p700 = pneg %p225
      %p701 = pneg %p249
      %p702 = pneg %p246
      %p703 = pneg %p270
      %p704 = pneg %p267
      %p705 = pneg %p291
      %p706 = pneg %p288
      %p707 = pneg %p312
      %p708 = pneg %p309
      %p709 = pneg %p333
      %p710 = pneg %p330
      %p711 = pneg %p354
      %p712 = pneg %p351
      %p713 = pneg %p375
      %p714 = pneg %p372
      %p715 = pneg %p396
      %p716 = pneg %p393
      %p717 = pneg %p417
      %p718 = pneg %p414
      %p719 = pneg %p443
      %p720 = pneg %p440
      %p721 = scmp.lt.s32.totalorder %s34, 1
      %s722 = scalar_select %p721, %s34, 1
      %s723 = smul.addr %s722, 8
      %s724 = scalar_lea.vmem %s15, %s723
      %s725 = smul.u32 %s34, 3
      %s726 = sadd.s32 %s725, %s35
      %p727 = scmp.lt.s32.totalorder %s726, 3
      %s728 = scalar_select %p727, %s726, 3
      %s729 = smul.u32 8, %s728
      %s730 = ssub.s32 25, %s729
      %p731 = scmp.lt.s32.totalorder %s730, 8
      %s732 = scalar_select %p731, %s730, 8
      %s733 = smul.u32 128, %s732
      %p734 = scmp.lt.s32.totalorder %s729, 24
      %s735 = scalar_select %p734, %s729, 24
      %s736 = smul.addr %s735, 8
      %s737 = scalar_lea.vmem %s0, %s736
      %s738 = smul.u32 %s34, 3
      %s739 = sadd.s32 %s738, %s35
      %p740 = scmp.lt.s32.totalorder %s739, 3
      %s741 = scalar_select %p740, %s739, 3
      %s742 = smul.u32 8, %s741
      %s743 = ssub.s32 25, %s742
      %p744 = scmp.lt.s32.totalorder %s743, 8
      %s745 = scalar_select %p744, %s743, 8
      %s746 = smul.u32 128, %s745
      %s747 = smul.u32 %s34, 3
      %s748 = sadd.s32 %s747, %s35
      %p749 = scmp.lt.s32.totalorder %s748, 3
      %s750 = scalar_select %p749, %s748, 3
      %s751 = smul.u32 8, %s750
      %s752 = ssub.s32 25, %s751
      %p753 = scmp.lt.s32.totalorder %s752, 8
      %s754 = scalar_select %p753, %s752, 8
      %s755 = smul.u32 128, %s754
      %p756 = scmp.lt.s32.totalorder %s751, 24
      %s757 = scalar_select %p756, %s751, 24
      %s758 = smul.addr %s757, 8
      %s759 = scalar_lea.vmem %s1, %s758
      %s760 = smul.u32 %s34, 3
      %s761 = sadd.s32 %s760, %s35
      %p762 = scmp.lt.s32.totalorder %s761, 3
      %s763 = scalar_select %p762, %s761, 3
      %s764 = smul.u32 8, %s763
      %s765 = ssub.s32 25, %s764
      %p766 = scmp.lt.s32.totalorder %s765, 8
      %s767 = scalar_select %p766, %s765, 8
      %s768 = smul.u32 128, %s767
      %s769 = smul.u32 %s34, 3
      %s770 = sadd.s32 %s769, %s35
      %p771 = scmp.lt.s32.totalorder %s770, 3
      %s772 = scalar_select %p771, %s770, 3
      %s773 = smul.u32 8, %s772
      %s774 = ssub.s32 25, %s773
      %p775 = scmp.lt.s32.totalorder %s774, 8
      %s776 = scalar_select %p775, %s774, 8
      %s777 = smul.u32 128, %s776
      %p778 = scmp.lt.s32.totalorder %s773, 24
      %s779 = scalar_select %p778, %s773, 24
      %s780 = smul.addr %s779, 8
      %s781 = scalar_lea.vmem %s2, %s780
      %s782 = smul.u32 %s34, 3
      %s783 = sadd.s32 %s782, %s35
      %p784 = scmp.lt.s32.totalorder %s783, 3
      %s785 = scalar_select %p784, %s783, 3
      %s786 = smul.u32 8, %s785
      %s787 = ssub.s32 25, %s786
      %p788 = scmp.lt.s32.totalorder %s787, 8
      %s789 = scalar_select %p788, %s787, 8
      %s790 = smul.u32 128, %s789
      %s791 = smul.u32 %s34, 3
      %s792 = sadd.s32 %s791, %s35
      %p793 = scmp.lt.s32.totalorder %s792, 4
      %s794 = scalar_select %p793, %s792, 4
      %s795 = smul.u32 8, %s794
      %s796 = ssub.s32 38, %s795
      %p797 = scmp.lt.s32.totalorder %s796, 8
      %s798 = scalar_select %p797, %s796, 8
      %s799 = smul.u32 128, %s798
      %p800 = scmp.lt.s32.totalorder %s795, 37
      %s801 = scalar_select %p800, %s795, 37
      %s802 = smul.addr %s801, 8
      %s803 = scalar_lea.vmem %s3, %s802
      %s804 = smul.u32 %s34, 3
      %s805 = sadd.s32 %s804, %s35
      %p806 = scmp.lt.s32.totalorder %s805, 4
      %s807 = scalar_select %p806, %s805, 4
      %s808 = smul.u32 8, %s807
      %s809 = ssub.s32 38, %s808
      %p810 = scmp.lt.s32.totalorder %s809, 8
      %s811 = scalar_select %p810, %s809, 8
      %s812 = smul.u32 128, %s811
      %s813 = smul.u32 %s34, 3
      %s814 = sadd.s32 %s813, %s35
      %p815 = scmp.lt.s32.totalorder %s814, 4
      %s816 = scalar_select %p815, %s814, 4
      %s817 = smul.u32 8, %s816
      %s818 = ssub.s32 38, %s817
      %p819 = scmp.lt.s32.totalorder %s818, 8
      %s820 = scalar_select %p819, %s818, 8
      %s821 = smul.u32 128, %s820
      %p822 = scmp.lt.s32.totalorder %s817, 37
      %s823 = scalar_select %p822, %s817, 37
      %s824 = smul.addr %s823, 8
      %s825 = scalar_lea.vmem %s4, %s824
      %s826 = smul.u32 %s34, 3
      %s827 = sadd.s32 %s826, %s35
      %p828 = scmp.lt.s32.totalorder %s827, 4
      %s829 = scalar_select %p828, %s827, 4
      %s830 = smul.u32 8, %s829
      %s831 = ssub.s32 38, %s830
      %p832 = scmp.lt.s32.totalorder %s831, 8
      %s833 = scalar_select %p832, %s831, 8
      %s834 = smul.u32 128, %s833
      %p835 = scmp.lt.s32.totalorder %s34, 1
      %s836 = scalar_select %p835, %s34, 1
      %s837 = smul.addr %s836, 8
      %s838 = scalar_lea.vmem %s15, %s837
      %p840 = scmp.eq.s32.totalorder %s35, 0
      // Predicated region
      $region81: #{comp_identify_forward.1} parent=79 // pred_check
        %p841 = pneg %p840
      $region82: #{comp_identify_forward.1} parent=79 // pred_check_branch
        %843 = sbr.rel (%p841) target = $region84
      $region83: #{comp_identify_forward.1} parent=79 // pred_region
        %vm844 = vcmask 0
        %845 = vst.msk [vmem:[#allocation2] sm:$0x1] %vm844, 0.0
        %846 = vst.msk [vmem:[#allocation3] sm:$0x1] %vm844, 0.0
        %847 = vst.msk [vmem:[#allocation4] sm:$0x1] %vm844, 0.0
      $region84: #{comp_identify_forward.1} parent=79 // pred_fallthru
        _
      %s848 = smul.u32 %s34, 3
      %s849 = sadd.s32 %s848, %s35
      %s850 = smul.u32 %s849, 64
      %v851 = vlaneseq
      %v852 = vshrl.u32 %v851, 7
      %v853 = vadd.s32 %v852, 8
      %v854 = vadd.s32 %v852, 16
      %v855 = vadd.s32 %v852, 24
      %v856 = vadd.s32 %v852, 32
      %v857 = vadd.s32 %v852, 40
      %v858 = vadd.s32 %v852, 48
      %v859 = vadd.s32 %v852, 56
      %v860 = vstv %s850
      %v861 = vadd.s32 %v852, %v860
      %v862 = vadd.s32 %v853, %v860
      %v863 = vadd.s32 %v854, %v860
      %v864 = vadd.s32 %v855, %v860
      %v865 = vadd.s32 %v856, %v860
      %v866 = vadd.s32 %v857, %v860
      %v867 = vadd.s32 %v858, %v860
      %v868 = vadd.s32 %v859, %v860
      %p869 = scmp.lt.s32.totalorder %s850, 200
      // Predicated region
      $region85: #{comp_identify_forward.1} parent=79 // pred_check
        %p870 = pneg %p869
      $region86: #{comp_identify_forward.1} parent=79 // pred_check_branch
        %872 = sbr.rel (%p870) target = $region88
      $region87: #{comp_identify_forward.1} parent=79 // pred_region
        %v873 = vld [vmem:[%s737] sm:$0xff]
        %v874 = vld [vmem:[%s737 + $0x8] sm:$0xff]
        %v875 = vld [vmem:[%s737 + $0x10] sm:$0xff]
        %v876 = vld [vmem:[%s737 + $0x18] sm:$0xff]
        %v877 = vld [vmem:[%s737 + $0x20] sm:$0xff]
        %v878 = vld [vmem:[%s737 + $0x28] sm:$0xff]
        %v879 = vld [vmem:[%s737 + $0x30] sm:$0xff]
        %v880 = vld [vmem:[%s737 + $0x38] sm:$0xff]
        %v881 = vpack.c.bf16 %v874, %v873
        %v882 = vpack.c.bf16 %v876, %v875
        %v883 = vpack.c.bf16 %v878, %v877
        %v884 = vpack.c.bf16 %v880, %v879
        %v885 = vld [vmem:[%s5] sm:$0xf]
        %v886 = vld [vmem:[%s5 + $0x4] sm:$0xf]
        %v887 = vld [vmem:[%s5 + $0x8] sm:$0xf]
        %v888 = vld [vmem:[%s5 + $0xc] sm:$0xf]
        %v889 = vld [vmem:[%s6] sm:$0x1]
        %v891 = vlaneseq
        %v892 = vshrl.u32 %v891, 7
        %v893 = vsub.s32 0, %v892
        %v894 = vrot.slane %v889, %v893
        %v900 = vunpack.c.l.b16 %v885
        %v901 = vunpack.c.l.b16 %v886
        %v902 = vunpack.c.l.b16 %v887
        %v903 = vunpack.c.l.b16 %v888
        %v904 = vpack.c.b16 %v901, %v900
        %v905 = vpack.c.b16 %v903, %v902
        %vm908 = vcmask 261120
        %v910 = vsel %vm908, %v881, 0
        %v913 = vsel %vm908, %v882, 0
        %v916 = vsel %vm908, %v883, 0
        %v919 = vsel %vm908, %v884, 0
        %921 = vmatprep.subr.bf16.mxu0 0
        %922 = vmatpush1.bf16.msra.mxu0 %v904
        %923 = vmatprep.subr.bf16.mxu0 0
        %924 = vmatpush1.bf16.msra.mxu0 %v905
        %925 = vmatprep.subr.bf16.mxu0 0
        %926 = vmatpush1.bf16.msra.mxu0 0
        %927 = vmatprep.subr.bf16.mxu0 0
        %928 = vmatpush1.bf16.msra.mxu0 0
        %929 = vmatprep.subr.bf16.mxu0 0
        %930 = vmatpush1.bf16.msra.mxu0 0
        %931 = vmatprep.subr.bf16.mxu0 0
        %932 = vmatpush1.bf16.msra.mxu0 0
        %933 = vmatprep.subr.bf16.mxu0 0
        %934 = vmatpush1.bf16.msra.mxu0 0
        %935 = vmatprep.subr.bf16.mxu0 0
        %936 = vmatpush1.bf16.msra.mxu0 0
        %937 = vmatprep.subr.bf16.mxu0 0
        %938 = vmatpush1.bf16.msra.mxu0 0
        %939 = vmatprep.subr.bf16.mxu0 0
        %940 = vmatpush1.bf16.msra.mxu0 0
        %941 = vmatprep.subr.bf16.mxu0 0
        %942 = vmatpush1.bf16.msra.mxu0 0
        %943 = vmatprep.subr.bf16.mxu0 0
        %944 = vmatpush1.bf16.msra.mxu0 0
        %945 = vmatprep.subr.bf16.mxu0 0
        %946 = vmatpush1.bf16.msra.mxu0 0
        %947 = vmatprep.subr.bf16.mxu0 0
        %948 = vmatpush1.bf16.msra.mxu0 0
        %949 = vmatprep.subr.bf16.mxu0 0
        %950 = vmatpush1.bf16.msra.mxu0 0
        %951 = vmatprep.subr.bf16.mxu0 0
        %952 = vmatpush1.bf16.msra.mxu0 0
        %953 = vmatprep.mubr.bf16.mxu0 0
        %954 = vmatmul.mubr.bf16.gmra.mrb[0].mxu0 %v910
        %v955 = vpop.f32.mrb[0].mxu0
        %v956 = vadd.f32 %v894, %v955
        %v957 = vpop.f32.mrb[0].mxu0
        %v958 = vpop.f32.mrb[0].mxu0
        %v959 = vadd.f32 %v894, %v958
        %v960 = vpop.f32.mrb[0].mxu0
        %961 = vmatprep.mubr.bf16.mxu0 0
        %962 = vmatmul.mubr.bf16.gmra.mrb[0].mxu0 %v913
        %v963 = vpop.f32.mrb[0].mxu0
        %v964 = vadd.f32 %v894, %v963
        %v965 = vpop.f32.mrb[0].mxu0
        %v966 = vpop.f32.mrb[0].mxu0
        %v967 = vadd.f32 %v894, %v966
        %v968 = vpop.f32.mrb[0].mxu0
        %969 = vmatprep.mubr.bf16.mxu0 0
        %970 = vmatmul.mubr.bf16.gmra.mrb[0].mxu0 %v916
        %v971 = vpop.f32.mrb[0].mxu0
        %v972 = vadd.f32 %v894, %v971
        %v973 = vpop.f32.mrb[0].mxu0
        %v974 = vpop.f32.mrb[0].mxu0
        %v975 = vadd.f32 %v894, %v974
        %v976 = vpop.f32.mrb[0].mxu0
        %977 = vmatprep.mubr.bf16.mxu0 0
        %978 = vmatmul.mubr.bf16.gmra.mrb[0].mxu0 %v919
        %v979 = vpop.f32.mrb[0].mxu0
        %v980 = vadd.f32 %v894, %v979
        %v981 = vpop.f32.mrb[0].mxu0
        %v982 = vpop.f32.mrb[0].mxu0
        %v983 = vadd.f32 %v894, %v982
        %v984 = vpop.f32.mrb[0].mxu0
        %985 = vdwg.mxu0
        %v986 = vmax.f32 %v956, 0.0
        %v987 = vmax.f32 %v959, 0.0
        %v988 = vmax.f32 %v964, 0.0
        %v989 = vmax.f32 %v967, 0.0
        %v990 = vmax.f32 %v972, 0.0
        %v991 = vmax.f32 %v975, 0.0
        %v992 = vmax.f32 %v980, 0.0
        %v993 = vmax.f32 %v983, 0.0
        %v994 = vpack.c.bf16 %v987, %v986
        %v995 = vpack.c.bf16 %v989, %v988
        %v996 = vpack.c.bf16 %v991, %v990
        %v997 = vpack.c.bf16 %v993, %v992
        %v998 = vld [vmem:[%s7] sm:$0xf]
        %v999 = vld [vmem:[%s7 + $0x4] sm:$0xf]
        %v1000 = vld [vmem:[%s7 + $0x8] sm:$0xf]
        %v1001 = vld [vmem:[%s7 + $0xc] sm:$0xf]
        %v1002 = vld [vmem:[%s8] sm:$0x1]
        %v1004 = vlaneseq
        %v1005 = vshrl.u32 %v1004, 7
        %v1006 = vsub.s32 0, %v1005
        %v1007 = vrot.slane %v1002, %v1006
        %v1013 = vunpack.c.l.b16 %v998
        %v1014 = vunpack.c.l.b16 %v999
        %v1015 = vunpack.c.l.b16 %v1000
        %v1016 = vunpack.c.l.b16 %v1001
        %v1017 = vpack.c.b16 %v1014, %v1013
        %v1018 = vpack.c.b16 %v1016, %v1015
        %v1022 = vsel %vm908, %v994, 0
        %v1025 = vsel %vm908, %v995, 0
        %v1028 = vsel %vm908, %v996, 0
        %v1031 = vsel %vm908, %v997, 0
        %1033 = vmatprep.subr.bf16.mxu0 0
        %1034 = vmatpush1.bf16.msra.mxu0 %v1017
        %1035 = vmatprep.subr.bf16.mxu0 0
        %1036 = vmatpush1.bf16.msra.mxu0 %v1018
        %1037 = vmatprep.subr.bf16.mxu0 0
        %1038 = vmatpush1.bf16.msra.mxu0 0
        %1039 = vmatprep.subr.bf16.mxu0 0
        %1040 = vmatpush1.bf16.msra.mxu0 0
        %1041 = vmatprep.subr.bf16.mxu0 0
        %1042 = vmatpush1.bf16.msra.mxu0 0
        %1043 = vmatprep.subr.bf16.mxu0 0
        %1044 = vmatpush1.bf16.msra.mxu0 0
        %1045 = vmatprep.subr.bf16.mxu0 0
        %1046 = vmatpush1.bf16.msra.mxu0 0
        %1047 = vmatprep.subr.bf16.mxu0 0
        %1048 = vmatpush1.bf16.msra.mxu0 0
        %1049 = vmatprep.subr.bf16.mxu0 0
        %1050 = vmatpush1.bf16.msra.mxu0 0
        %1051 = vmatprep.subr.bf16.mxu0 0
        %1052 = vmatpush1.bf16.msra.mxu0 0
        %1053 = vmatprep.subr.bf16.mxu0 0
        %1054 = vmatpush1.bf16.msra.mxu0 0
        %1055 = vmatprep.subr.bf16.mxu0 0
        %1056 = vmatpush1.bf16.msra.mxu0 0
        %1057 = vmatprep.subr.bf16.mxu0 0
        %1058 = vmatpush1.bf16.msra.mxu0 0
        %1059 = vmatprep.subr.bf16.mxu0 0
        %1060 = vmatpush1.bf16.msra.mxu0 0
        %1061 = vmatprep.subr.bf16.mxu0 0
        %1062 = vmatpush1.bf16.msra.mxu0 0
        %1063 = vmatprep.subr.bf16.mxu0 0
        %1064 = vmatpush1.bf16.msra.mxu0 0
        %1065 = vmatprep.mubr.bf16.mxu0 0
        %1066 = vmatmul.mubr.bf16.gmra.mrb[0].mxu0 %v1022
        %v1067 = vpop.f32.mrb[0].mxu0
        %v1068 = vadd.f32 %v1007, %v1067
        %v1069 = vpop.f32.mrb[0].mxu0
        %v1070 = vpop.f32.mrb[0].mxu0
        %v1071 = vadd.f32 %v1007, %v1070
        %v1072 = vpop.f32.mrb[0].mxu0
        %1073 = vmatprep.mubr.bf16.mxu0 0
        %1074 = vmatmul.mubr.bf16.gmra.mrb[0].mxu0 %v1025
        %v1075 = vpop.f32.mrb[0].mxu0
        %v1076 = vadd.f32 %v1007, %v1075
        %v1077 = vpop.f32.mrb[0].mxu0
        %v1078 = vpop.f32.mrb[0].mxu0
        %v1079 = vadd.f32 %v1007, %v1078
        %v1080 = vpop.f32.mrb[0].mxu0
        %1081 = vmatprep.mubr.bf16.mxu0 0
        %1082 = vmatmul.mubr.bf16.gmra.mrb[0].mxu0 %v1028
        %v1083 = vpop.f32.mrb[0].mxu0
        %v1084 = vadd.f32 %v1007, %v1083
        %v1085 = vpop.f32.mrb[0].mxu0
        %v1086 = vpop.f32.mrb[0].mxu0
        %v1087 = vadd.f32 %v1007, %v1086
        %v1088 = vpop.f32.mrb[0].mxu0
        %1089 = vmatprep.mubr.bf16.mxu0 0
        %1090 = vmatmul.mubr.bf16.gmra.mrb[0].mxu0 %v1031
        %v1091 = vpop.f32.mrb[0].mxu0
        %v1092 = vadd.f32 %v1007, %v1091
        %v1093 = vpop.f32.mrb[0].mxu0
        %v1094 = vpop.f32.mrb[0].mxu0
        %v1095 = vadd.f32 %v1007, %v1094
        %v1096 = vpop.f32.mrb[0].mxu0
        %1097 = vdwg.mxu0
        %v1098 = vld [vmem:[%s9] sm:$0xf]
        %v1099 = vld [vmem:[%s9 + $0x4] sm:$0xf]
        %v1100 = vld [vmem:[%s9 + $0x8] sm:$0xf]
        %v1101 = vld [vmem:[%s9 + $0xc] sm:$0xf]
        %v1102 = vld [vmem:[#allocation5] sm:$0x1]
        %v1104 = vlaneseq
        %v1105 = vshrl.u32 %v1104, 7
        %v1106 = vsub.s32 0, %v1105
        %v1107 = vrot.slane %v1102, %v1106
        %1113 = vrot.lane.b32.xlu0 %v994, 96
        %v1114 = vpop.permute.xlu0 %1113
        %1115 = vrot.lane.b32.xlu0 %v995, 96
        %v1116 = vpop.permute.xlu0 %1115
        %1117 = vrot.lane.b32.xlu0 %v996, 96
        %v1118 = vpop.permute.xlu0 %1117
        %1119 = vrot.lane.b32.xlu0 %v997, 96
        %v1120 = vpop.permute.xlu0 %1119
        %v1125 = vunpack.c.l.b16 %v1098
        %v1126 = vunpack.c.l.b16 %v1099
        %v1127 = vunpack.c.l.b16 %v1100
        %v1128 = vunpack.c.l.b16 %v1101
        %v1129 = vpack.c.b16 %v1126, %v1125
        %v1130 = vpack.c.b16 %v1128, %v1127
        %v1134 = vsel %vm908, %v1114, 0
        %v1137 = vsel %vm908, %v1116, 0
        %v1140 = vsel %vm908, %v1118, 0
        %v1143 = vsel %vm908, %v1120, 0
        %1145 = vmatprep.subr.bf16.mxu0 0
        %1146 = vmatpush1.bf16.msra.mxu0 %v1129
        %1147 = vmatprep.subr.bf16.mxu0 0
        %1148 = vmatpush1.bf16.msra.mxu0 %v1130
        %1149 = vmatprep.subr.bf16.mxu0 0
        %1150 = vmatpush1.bf16.msra.mxu0 0
        %1151 = vmatprep.subr.bf16.mxu0 0
        %1152 = vmatpush1.bf16.msra.mxu0 0
        %1153 = vmatprep.subr.bf16.mxu0 0
        %1154 = vmatpush1.bf16.msra.mxu0 0
        %1155 = vmatprep.subr.bf16.mxu0 0
        %1156 = vmatpush1.bf16.msra.mxu0 0
        %1157 = vmatprep.subr.bf16.mxu0 0
        %1158 = vmatpush1.bf16.msra.mxu0 0
        %1159 = vmatprep.subr.bf16.mxu0 0
        %1160 = vmatpush1.bf16.msra.mxu0 0
        %1161 = vmatprep.subr.bf16.mxu0 0
        %1162 = vmatpush1.bf16.msra.mxu0 0
        %1163 = vmatprep.subr.bf16.mxu0 0
        %1164 = vmatpush1.bf16.msra.mxu0 0
        %1165 = vmatprep.subr.bf16.mxu0 0
        %1166 = vmatpush1.bf16.msra.mxu0 0
        %1167 = vmatprep.subr.bf16.mxu0 0
        %1168 = vmatpush1.bf16.msra.mxu0 0
        %1169 = vmatprep.subr.bf16.mxu0 0
        %1170 = vmatpush1.bf16.msra.mxu0 0
        %1171 = vmatprep.subr.bf16.mxu0 0
        %1172 = vmatpush1.bf16.msra.mxu0 0
        %1173 = vmatprep.subr.bf16.mxu0 0
        %1174 = vmatpush1.bf16.msra.mxu0 0
        %1175 = vmatprep.subr.bf16.mxu0 0
        %1176 = vmatpush1.bf16.msra.mxu0 0
        %1177 = vmatprep.mubr.bf16.mxu0 0
        %1178 = vmatmul.mubr.bf16.gmra.mrb[0].mxu0 %v1134
        %v1179 = vpop.f32.mrb[0].mxu0
        %v1180 = vadd.f32 %v1107, %v1179
        %v1181 = vpop.f32.mrb[0].mxu0
        %v1182 = vpop.f32.mrb[0].mxu0
        %v1183 = vadd.f32 %v1107, %v1182
        %v1184 = vpop.f32.mrb[0].mxu0
        %1185 = vmatprep.mubr.bf16.mxu0 0
        %1186 = vmatmul.mubr.bf16.gmra.mrb[0].mxu0 %v1137
        %v1187 = vpop.f32.mrb[0].mxu0
        %v1188 = vadd.f32 %v1107, %v1187
        %v1189 = vpop.f32.mrb[0].mxu0
        %v1190 = vpop.f32.mrb[0].mxu0
        %v1191 = vadd.f32 %v1107, %v1190
        %v1192 = vpop.f32.mrb[0].mxu0
        %1193 = vmatprep.mubr.bf16.mxu0 0
        %1194 = vmatmul.mubr.bf16.gmra.mrb[0].mxu0 %v1140
        %v1195 = vpop.f32.mrb[0].mxu0
        %v1196 = vadd.f32 %v1107, %v1195
        %v1197 = vpop.f32.mrb[0].mxu0
        %v1198 = vpop.f32.mrb[0].mxu0
        %v1199 = vadd.f32 %v1107, %v1198
        %v1200 = vpop.f32.mrb[0].mxu0
        %1201 = vmatprep.mubr.bf16.mxu0 0
        %1202 = vmatmul.mubr.bf16.gmra.mrb[0].mxu0 %v1143
        %v1203 = vpop.f32.mrb[0].mxu0
        %v1204 = vadd.f32 %v1107, %v1203
        %v1205 = vpop.f32.mrb[0].mxu0
        %v1206 = vpop.f32.mrb[0].mxu0
        %v1207 = vadd.f32 %v1107, %v1206
        %v1208 = vpop.f32.mrb[0].mxu0
        %1209 = vdwg.mxu0
        %vm1210 = vcmp.lt.s32.totalorder %v861, 200
        %vm1211 = vcmp.lt.s32.totalorder %v862, 200
        %vm1212 = vcmp.lt.s32.totalorder %v863, 200
        %vm1213 = vcmp.lt.s32.totalorder %v864, 200
        %vm1214 = vcmp.lt.s32.totalorder %v865, 200
        %vm1215 = vcmp.lt.s32.totalorder %v866, 200
        %vm1216 = vcmp.lt.s32.totalorder %v867, 200
        %vm1217 = vcmp.lt.s32.totalorder %v868, 200
        %v1218 = vld [vmem:[#allocation2] sm:$0x1]
        %v1219 = vld [vmem:[%s759] sm:$0xff]
        %v1220 = vld [vmem:[%s759 + $0x8] sm:$0xff]
        %v1221 = vld [vmem:[%s759 + $0x10] sm:$0xff]
        %v1222 = vld [vmem:[%s759 + $0x18] sm:$0xff]
        %v1223 = vld [vmem:[%s759 + $0x20] sm:$0xff]
        %v1224 = vld [vmem:[%s759 + $0x28] sm:$0xff]
        %v1225 = vld [vmem:[%s759 + $0x30] sm:$0xff]
        %v1226 = vld [vmem:[%s759 + $0x38] sm:$0xff]
        %v1227 = vmax.f32 %v1068, 0.0
        %v1228 = vmax.f32 %v1071, 0.0
        %v1229 = vmax.f32 %v1076, 0.0
        %v1230 = vmax.f32 %v1079, 0.0
        %v1231 = vmax.f32 %v1084, 0.0
        %v1232 = vmax.f32 %v1087, 0.0
        %v1233 = vmax.f32 %v1092, 0.0
        %v1234 = vmax.f32 %v1095, 0.0
        %v1235 = vmul.f32 %v1068, %v1219
        %v1236 = vmul.f32 %v1071, %v1220
        %v1237 = vmul.f32 %v1076, %v1221
        %v1238 = vmul.f32 %v1079, %v1222
        %v1239 = vmul.f32 %v1084, %v1223
        %v1240 = vmul.f32 %v1087, %v1224
        %v1241 = vmul.f32 %v1092, %v1225
        %v1242 = vmul.f32 %v1095, %v1226
        %v1243 = vsub.f32 %v1227, %v1235
        %v1244 = vsub.f32 %v1228, %v1236
        %v1245 = vsub.f32 %v1229, %v1237
        %v1246 = vsub.f32 %v1230, %v1238
        %v1247 = vsub.f32 %v1231, %v1239
        %v1248 = vsub.f32 %v1232, %v1240
        %v1249 = vsub.f32 %v1233, %v1241
        %v1250 = vsub.f32 %v1234, %v1242
        %v1251 = vand.u32 2147483647, %v1068
        %v1252 = vand.u32 2147483647, %v1071
        %v1253 = vand.u32 2147483647, %v1076
        %v1254 = vand.u32 2147483647, %v1079
        %v1255 = vand.u32 2147483647, %v1084
        %v1256 = vand.u32 2147483647, %v1087
        %v1257 = vand.u32 2147483647, %v1092
        %v1258 = vand.u32 2147483647, %v1095
        %v1259 = vsub.f32 0.0, %v1251
        %v1260 = vsub.f32 0.0, %v1252
        %v1261 = vsub.f32 0.0, %v1253
        %v1262 = vsub.f32 0.0, %v1254
        %v1263 = vsub.f32 0.0, %v1255
        %v1264 = vsub.f32 0.0, %v1256
        %v1265 = vsub.f32 0.0, %v1257
        %v1266 = vsub.f32 0.0, %v1258
        %v1267 = vmul.f32 %v1259, 1.442695
        %v1268 = vpow.pop %v1267
        %v1269 = vmul.f32 %v1260, 1.442695
        %v1270 = vpow.pop %v1269
        %v1271 = vmul.f32 %v1261, 1.442695
        %v1272 = vpow.pop %v1271
        %v1273 = vmul.f32 %v1262, 1.442695
        %v1274 = vpow.pop %v1273
        %v1275 = vmul.f32 %v1263, 1.442695
        %v1276 = vpow.pop %v1275
        %v1277 = vmul.f32 %v1264, 1.442695
        %v1278 = vpow.pop %v1277
        %v1279 = vmul.f32 %v1265, 1.442695
        %v1280 = vpow.pop %v1279
        %v1281 = vmul.f32 %v1266, 1.442695
        %v1282 = vpow.pop %v1281
        %v1283 = vadd.f32 %v1268, 1.0
        %v1284 = vlog2.pop %v1283
        %v1285 = vmul.f32 %v1284, 0.6931472
        %v1286 = vmul.f32 -0.5, %v1268
        %v1287 = vadd.f32 %v1286, 1.0
        %v1288 = vmul.f32 %v1287, %v1268
        %v1289 = vand.u32 2147483647, %v1268
        %vm1290 = vcmp.lt.f32.partialorder %v1289, 0.0004427343
        %v1291 = vsel %vm1290, %v1288, %v1285
        %v1292 = vadd.f32 %v1270, 1.0
        %v1293 = vlog2.pop %v1292
        %v1294 = vmul.f32 %v1293, 0.6931472
        %v1295 = vmul.f32 -0.5, %v1270
        %v1296 = vadd.f32 %v1295, 1.0
        %v1297 = vmul.f32 %v1296, %v1270
        %v1298 = vand.u32 2147483647, %v1270
        %vm1299 = vcmp.lt.f32.partialorder %v1298, 0.0004427343
        %v1300 = vsel %vm1299, %v1297, %v1294
        %v1301 = vadd.f32 %v1272, 1.0
        %v1302 = vlog2.pop %v1301
        %v1303 = vmul.f32 %v1302, 0.6931472
        %v1304 = vmul.f32 -0.5, %v1272
        %v1305 = vadd.f32 %v1304, 1.0
        %v1306 = vmul.f32 %v1305, %v1272
        %v1307 = vand.u32 2147483647, %v1272
        %vm1308 = vcmp.lt.f32.partialorder %v1307, 0.0004427343
        %v1309 = vsel %vm1308, %v1306, %v1303
        %v1310 = vadd.f32 %v1274, 1.0
        %v1311 = vlog2.pop %v1310
        %v1312 = vmul.f32 %v1311, 0.6931472
        %v1313 = vmul.f32 -0.5, %v1274
        %v1314 = vadd.f32 %v1313, 1.0
        %v1315 = vmul.f32 %v1314, %v1274
        %v1316 = vand.u32 2147483647, %v1274
        %vm1317 = vcmp.lt.f32.partialorder %v1316, 0.0004427343
        %v1318 = vsel %vm1317, %v1315, %v1312
        %v1319 = vadd.f32 %v1276, 1.0
        %v1320 = vlog2.pop %v1319
        %v1321 = vmul.f32 %v1320, 0.6931472
        %v1322 = vmul.f32 -0.5, %v1276
        %v1323 = vadd.f32 %v1322, 1.0
        %v1324 = vmul.f32 %v1323, %v1276
        %v1325 = vand.u32 2147483647, %v1276
        %vm1326 = vcmp.lt.f32.partialorder %v1325, 0.0004427343
        %v1327 = vsel %vm1326, %v1324, %v1321
        %v1328 = vadd.f32 %v1278, 1.0
        %v1329 = vlog2.pop %v1328
        %v1330 = vmul.f32 %v1329, 0.6931472
        %v1331 = vmul.f32 -0.5, %v1278
        %v1332 = vadd.f32 %v1331, 1.0
        %v1333 = vmul.f32 %v1332, %v1278
        %v1334 = vand.u32 2147483647, %v1278
        %vm1335 = vcmp.lt.f32.partialorder %v1334, 0.0004427343
        %v1336 = vsel %vm1335, %v1333, %v1330
        %v1337 = vadd.f32 %v1280, 1.0
        %v1338 = vlog2.pop %v1337
        %v1339 = vmul.f32 %v1338, 0.6931472
        %v1340 = vmul.f32 -0.5, %v1280
        %v1341 = vadd.f32 %v1340, 1.0
        %v1342 = vmul.f32 %v1341, %v1280
        %v1343 = vand.u32 2147483647, %v1280
        %vm1344 = vcmp.lt.f32.partialorder %v1343, 0.0004427343
        %v1345 = vsel %vm1344, %v1342, %v1339
        %v1346 = vadd.f32 %v1282, 1.0
        %v1347 = vlog2.pop %v1346
        %v1348 = vmul.f32 %v1347, 0.6931472
        %v1349 = vmul.f32 -0.5, %v1282
        %v1350 = vadd.f32 %v1349, 1.0
        %v1351 = vmul.f32 %v1350, %v1282
        %v1352 = vand.u32 2147483647, %v1282
        %vm1353 = vcmp.lt.f32.partialorder %v1352, 0.0004427343
        %v1354 = vsel %vm1353, %v1351, %v1348
        %v1355 = vadd.f32 %v1243, %v1291
        %v1356 = vadd.f32 %v1244, %v1300
        %v1357 = vadd.f32 %v1245, %v1309
        %v1358 = vadd.f32 %v1246, %v1318
        %v1359 = vadd.f32 %v1247, %v1327
        %v1360 = vadd.f32 %v1248, %v1336
        %v1361 = vadd.f32 %v1249, %v1345
        %v1362 = vadd.f32 %v1250, %v1354
        %v1363 = vsel %vm1210, 1, 0
        %v1364 = vsel %vm1211, 1, 0
        %v1365 = vsel %vm1212, 1, 0
        %v1366 = vsel %vm1213, 1, 0
        %v1367 = vsel %vm1214, 1, 0
        %v1368 = vsel %vm1215, 1, 0
        %v1369 = vsel %vm1216, 1, 0
        %v1370 = vsel %vm1217, 1, 0
        %vm1371 = vcmp.eq.s32.totalorder %v1363, 1
        %vm1372 = vcmp.eq.s32.totalorder %v1364, 1
        %vm1373 = vcmp.eq.s32.totalorder %v1365, 1
        %vm1374 = vcmp.eq.s32.totalorder %v1366, 1
        %vm1375 = vcmp.eq.s32.totalorder %v1367, 1
        %vm1376 = vcmp.eq.s32.totalorder %v1368, 1
        %vm1377 = vcmp.eq.s32.totalorder %v1369, 1
        %vm1378 = vcmp.eq.s32.totalorder %v1370, 1
        %v1379 = vsel %vm1371, %v1355, 0.0
        %v1380 = vsel %vm1372, %v1356, 0.0
        %v1381 = vsel %vm1373, %v1357, 0.0
        %v1382 = vsel %vm1374, %v1358, 0.0
        %v1383 = vsel %vm1375, %v1359, 0.0
        %v1384 = vsel %vm1376, %v1360, 0.0
        %v1385 = vsel %vm1377, %v1361, 0.0
        %v1386 = vsel %vm1378, %v1362, 0.0
        %vm1387 = vcmask 318464
        %v1388 = vsel %vm1387, %v1379, 0.0
        %1389 = vadd.xlane.f32.xlu0 %v1388
        %v1390 = vpop.xlane.xlu0 %1389
        %v1391 = vsel %vm1387, %v1380, 0.0
        %1392 = vadd.xlane.f32.xlu0 %v1391
        %v1393 = vpop.xlane.xlu0 %1392
        %v1394 = vsel %vm1387, %v1381, 0.0
        %1395 = vadd.xlane.f32.xlu0 %v1394
        %v1396 = vpop.xlane.xlu0 %1395
        %v1397 = vsel %vm1387, %v1382, 0.0
        %1398 = vadd.xlane.f32.xlu0 %v1397
        %v1399 = vpop.xlane.xlu0 %1398
        %v1400 = vsel %vm1387, %v1383, 0.0
        %1401 = vadd.xlane.f32.xlu0 %v1400
        %v1402 = vpop.xlane.xlu0 %1401
        %v1403 = vsel %vm1387, %v1384, 0.0
        %1404 = vadd.xlane.f32.xlu0 %v1403
        %v1405 = vpop.xlane.xlu0 %1404
        %v1406 = vsel %vm1387, %v1385, 0.0
        %1407 = vadd.xlane.f32.xlu0 %v1406
        %v1408 = vpop.xlane.xlu0 %1407
        %v1409 = vsel %vm1387, %v1386, 0.0
        %1410 = vadd.xlane.f32.xlu0 %v1409
        %v1411 = vpop.xlane.xlu0 %1410
        %v1412 = vadd.f32 %v1390, %v1393
        %v1413 = vadd.f32 %v1412, %v1396
        %v1414 = vadd.f32 %v1413, %v1399
        %v1415 = vadd.f32 %v1414, %v1402
        %v1416 = vadd.f32 %v1415, %v1405
        %v1417 = vadd.f32 %v1416, %v1408
        %v1418 = vadd.f32 %v1417, %v1411
        %v1419 = vrot.slane %v1418, 4
        %v1420 = vadd.f32 %v1418, %v1419
        %v1421 = vrot.slane %v1420, 2
        %v1422 = vadd.f32 %v1420, %v1421
        %v1423 = vrot.slane %v1422, 1
        %v1424 = vadd.f32 %v1422, %v1423
        %v1425 = vadd.f32 %v1218, %v1424
        %vm1426 = vcmask 0
        %1427 = vst.msk [vmem:[#allocation2] sm:$0x1] %vm1426, %v1425
        %v1428 = vld [vmem:[#allocation3] sm:$0x1]
        %v1429 = vld [vmem:[%s781] sm:$0xff]
        %v1430 = vld [vmem:[%s781 + $0x8] sm:$0xff]
        %v1431 = vld [vmem:[%s781 + $0x10] sm:$0xff]
        %v1432 = vld [vmem:[%s781 + $0x18] sm:$0xff]
        %v1433 = vld [vmem:[%s781 + $0x20] sm:$0xff]
        %v1434 = vld [vmem:[%s781 + $0x28] sm:$0xff]
        %v1435 = vld [vmem:[%s781 + $0x30] sm:$0xff]
        %v1436 = vld [vmem:[%s781 + $0x38] sm:$0xff]
        %v1437 = vmax.f32 %v1180, 0.0
        %v1438 = vmax.f32 %v1183, 0.0
        %v1439 = vmax.f32 %v1188, 0.0
        %v1440 = vmax.f32 %v1191, 0.0
        %v1441 = vmax.f32 %v1196, 0.0
        %v1442 = vmax.f32 %v1199, 0.0
        %v1443 = vmax.f32 %v1204, 0.0
        %v1444 = vmax.f32 %v1207, 0.0
        %v1445 = vmul.f32 %v1180, %v1429
        %v1446 = vmul.f32 %v1183, %v1430
        %v1447 = vmul.f32 %v1188, %v1431
        %v1448 = vmul.f32 %v1191, %v1432
        %v1449 = vmul.f32 %v1196, %v1433
        %v1450 = vmul.f32 %v1199, %v1434
        %v1451 = vmul.f32 %v1204, %v1435
        %v1452 = vmul.f32 %v1207, %v1436
        %v1453 = vsub.f32 %v1437, %v1445
        %v1454 = vsub.f32 %v1438, %v1446
        %v1455 = vsub.f32 %v1439, %v1447
        %v1456 = vsub.f32 %v1440, %v1448
        %v1457 = vsub.f32 %v1441, %v1449
        %v1458 = vsub.f32 %v1442, %v1450
        %v1459 = vsub.f32 %v1443, %v1451
        %v1460 = vsub.f32 %v1444, %v1452
        %v1461 = vand.u32 2147483647, %v1180
        %v1462 = vand.u32 2147483647, %v1183
        %v1463 = vand.u32 2147483647, %v1188
        %v1464 = vand.u32 2147483647, %v1191
        %v1465 = vand.u32 2147483647, %v1196
        %v1466 = vand.u32 2147483647, %v1199
        %v1467 = vand.u32 2147483647, %v1204
        %v1468 = vand.u32 2147483647, %v1207
        %v1469 = vsub.f32 0.0, %v1461
        %v1470 = vsub.f32 0.0, %v1462
        %v1471 = vsub.f32 0.0, %v1463
        %v1472 = vsub.f32 0.0, %v1464
        %v1473 = vsub.f32 0.0, %v1465
        %v1474 = vsub.f32 0.0, %v1466
        %v1475 = vsub.f32 0.0, %v1467
        %v1476 = vsub.f32 0.0, %v1468
        %v1477 = vmul.f32 %v1469, 1.442695
        %v1478 = vpow.pop %v1477
        %v1479 = vmul.f32 %v1470, 1.442695
        %v1480 = vpow.pop %v1479
        %v1481 = vmul.f32 %v1471, 1.442695
        %v1482 = vpow.pop %v1481
        %v1483 = vmul.f32 %v1472, 1.442695
        %v1484 = vpow.pop %v1483
        %v1485 = vmul.f32 %v1473, 1.442695
        %v1486 = vpow.pop %v1485
        %v1487 = vmul.f32 %v1474, 1.442695
        %v1488 = vpow.pop %v1487
        %v1489 = vmul.f32 %v1475, 1.442695
        %v1490 = vpow.pop %v1489
        %v1491 = vmul.f32 %v1476, 1.442695
        %v1492 = vpow.pop %v1491
        %v1493 = vadd.f32 %v1478, 1.0
        %v1494 = vlog2.pop %v1493
        %v1495 = vmul.f32 %v1494, 0.6931472
        %v1496 = vmul.f32 -0.5, %v1478
        %v1497 = vadd.f32 %v1496, 1.0
        %v1498 = vmul.f32 %v1497, %v1478
        %v1499 = vand.u32 2147483647, %v1478
        %vm1500 = vcmp.lt.f32.partialorder %v1499, 0.0004427343
        %v1501 = vsel %vm1500, %v1498, %v1495
        %v1502 = vadd.f32 %v1480, 1.0
        %v1503 = vlog2.pop %v1502
        %v1504 = vmul.f32 %v1503, 0.6931472
        %v1505 = vmul.f32 -0.5, %v1480
        %v1506 = vadd.f32 %v1505, 1.0
        %v1507 = vmul.f32 %v1506, %v1480
        %v1508 = vand.u32 2147483647, %v1480
        %vm1509 = vcmp.lt.f32.partialorder %v1508, 0.0004427343
        %v1510 = vsel %vm1509, %v1507, %v1504
        %v1511 = vadd.f32 %v1482, 1.0
        %v1512 = vlog2.pop %v1511
        %v1513 = vmul.f32 %v1512, 0.6931472
        %v1514 = vmul.f32 -0.5, %v1482
        %v1515 = vadd.f32 %v1514, 1.0
        %v1516 = vmul.f32 %v1515, %v1482
        %v1517 = vand.u32 2147483647, %v1482
        %vm1518 = vcmp.lt.f32.partialorder %v1517, 0.0004427343
        %v1519 = vsel %vm1518, %v1516, %v1513
        %v1520 = vadd.f32 %v1484, 1.0
        %v1521 = vlog2.pop %v1520
        %v1522 = vmul.f32 %v1521, 0.6931472
        %v1523 = vmul.f32 -0.5, %v1484
        %v1524 = vadd.f32 %v1523, 1.0
        %v1525 = vmul.f32 %v1524, %v1484
        %v1526 = vand.u32 2147483647, %v1484
        %vm1527 = vcmp.lt.f32.partialorder %v1526, 0.0004427343
        %v1528 = vsel %vm1527, %v1525, %v1522
        %v1529 = vadd.f32 %v1486, 1.0
        %v1530 = vlog2.pop %v1529
        %v1531 = vmul.f32 %v1530, 0.6931472
        %v1532 = vmul.f32 -0.5, %v1486
        %v1533 = vadd.f32 %v1532, 1.0
        %v1534 = vmul.f32 %v1533, %v1486
        %v1535 = vand.u32 2147483647, %v1486
        %vm1536 = vcmp.lt.f32.partialorder %v1535, 0.0004427343
        %v1537 = vsel %vm1536, %v1534, %v1531
        %v1538 = vadd.f32 %v1488, 1.0
        %v1539 = vlog2.pop %v1538
        %v1540 = vmul.f32 %v1539, 0.6931472
        %v1541 = vmul.f32 -0.5, %v1488
        %v1542 = vadd.f32 %v1541, 1.0
        %v1543 = vmul.f32 %v1542, %v1488
        %v1544 = vand.u32 2147483647, %v1488
        %vm1545 = vcmp.lt.f32.partialorder %v1544, 0.0004427343
        %v1546 = vsel %vm1545, %v1543, %v1540
        %v1547 = vadd.f32 %v1490, 1.0
        %v1548 = vlog2.pop %v1547
        %v1549 = vmul.f32 %v1548, 0.6931472
        %v1550 = vmul.f32 -0.5, %v1490
        %v1551 = vadd.f32 %v1550, 1.0
        %v1552 = vmul.f32 %v1551, %v1490
        %v1553 = vand.u32 2147483647, %v1490
        %vm1554 = vcmp.lt.f32.partialorder %v1553, 0.0004427343
        %v1555 = vsel %vm1554, %v1552, %v1549
        %v1556 = vadd.f32 %v1492, 1.0
        %v1557 = vlog2.pop %v1556
        %v1558 = vmul.f32 %v1557, 0.6931472
        %v1559 = vmul.f32 -0.5, %v1492
        %v1560 = vadd.f32 %v1559, 1.0
        %v1561 = vmul.f32 %v1560, %v1492
        %v1562 = vand.u32 2147483647, %v1492
        %vm1563 = vcmp.lt.f32.partialorder %v1562, 0.0004427343
        %v1564 = vsel %vm1563, %v1561, %v1558
        %v1565 = vadd.f32 %v1453, %v1501
        %v1566 = vadd.f32 %v1454, %v1510
        %v1567 = vadd.f32 %v1455, %v1519
        %v1568 = vadd.f32 %v1456, %v1528
        %v1569 = vadd.f32 %v1457, %v1537
        %v1570 = vadd.f32 %v1458, %v1546
        %v1571 = vadd.f32 %v1459, %v1555
        %v1572 = vadd.f32 %v1460, %v1564
        %v1573 = vsel %vm1210, %v1565, 0.0
        %v1574 = vsel %vm1211, %v1566, 0.0
        %v1575 = vsel %vm1212, %v1567, 0.0
        %v1576 = vsel %vm1213, %v1568, 0.0
        %v1577 = vsel %vm1214, %v1569, 0.0
        %v1578 = vsel %vm1215, %v1570, 0.0
        %v1579 = vsel %vm1216, %v1571, 0.0
        %v1580 = vsel %vm1217, %v1572, 0.0
        %v1581 = vadd.f32 %v1573, 0.0
        %v1582 = vadd.f32 %v1574, 0.0
        %v1583 = vadd.f32 %v1575, 0.0
        %v1584 = vadd.f32 %v1576, 0.0
        %v1585 = vadd.f32 %v1577, 0.0
        %v1586 = vadd.f32 %v1578, 0.0
        %v1587 = vadd.f32 %v1579, 0.0
        %v1588 = vadd.f32 %v1580, 0.0
        %vm1589 = vcmask 7168
        %v1590 = vsel %vm1589, %v1581, 0.0
        %v1591 = vsel %vm1589, %v1582, 0.0
        %v1592 = vadd.f32 %v1590, %v1591
        %v1593 = vsel %vm1589, %v1583, 0.0
        %v1594 = vadd.f32 %v1592, %v1593
        %v1595 = vsel %vm1589, %v1584, 0.0
        %v1596 = vadd.f32 %v1594, %v1595
        %v1597 = vsel %vm1589, %v1585, 0.0
        %v1598 = vadd.f32 %v1596, %v1597
        %v1599 = vsel %vm1589, %v1586, 0.0
        %v1600 = vadd.f32 %v1598, %v1599
        %v1601 = vsel %vm1589, %v1587, 0.0
        %v1602 = vadd.f32 %v1600, %v1601
        %v1603 = vsel %vm1589, %v1588, 0.0
        %v1604 = vadd.f32 %v1602, %v1603
        %v1605 = vrot.slane %v1604, 4
        %v1606 = vadd.f32 %v1604, %v1605
        %v1607 = vrot.slane %v1606, 2
        %v1608 = vadd.f32 %v1606, %v1607
        %v1609 = vrot.slane %v1608, 1
        %v1610 = vadd.f32 %v1608, %v1609
        %v1611 = vadd.f32 %v1428, %v1610
        %1612 = vst.msk [vmem:[#allocation3] sm:$0x1] %vm1426, %v1611
      $region88: #{comp_identify_forward.1} parent=79 // pred_fallthru
        _
      %p1613 = scmp.lt.s32.totalorder %s850, 300
      // Predicated region
      $region89: #{comp_identify_forward.1} parent=79 // pred_check
        %p1614 = pneg %p1613
      $region90: #{comp_identify_forward.1} parent=79 // pred_check_branch
        %1616 = sbr.rel (%p1614) target = $region92
      $region91: #{comp_identify_forward.1} parent=79 // pred_region
        %v1617 = vld [vmem:[%s803] sm:$0xff]
        %v1618 = vld [vmem:[%s803 + $0x8] sm:$0xff]
        %v1619 = vld [vmem:[%s803 + $0x10] sm:$0xff]
        %v1620 = vld [vmem:[%s803 + $0x18] sm:$0xff]
        %v1621 = vld [vmem:[%s803 + $0x20] sm:$0xff]
        %v1622 = vld [vmem:[%s803 + $0x28] sm:$0xff]
        %v1623 = vld [vmem:[%s803 + $0x30] sm:$0xff]
        %v1624 = vld [vmem:[%s803 + $0x38] sm:$0xff]
        %v1625 = vpack.c.bf16 %v1618, %v1617
        %v1626 = vpack.c.bf16 %v1620, %v1619
        %v1627 = vpack.c.bf16 %v1622, %v1621
        %v1628 = vpack.c.bf16 %v1624, %v1623
        %v1629 = vld [vmem:[%s11] sm:$0xf]
        %v1630 = vld [vmem:[%s11 + $0x4] sm:$0xf]
        %v1631 = vld [vmem:[%s11 + $0x8] sm:$0xf]
        %v1632 = vld [vmem:[%s11 + $0xc] sm:$0xf]
        %v1633 = vld [vmem:[%s12] sm:$0x1]
        %v1635 = vlaneseq
        %v1636 = vshrl.u32 %v1635, 7
        %v1637 = vsub.s32 0, %v1636
        %v1638 = vrot.slane %v1633, %v1637
        %v1644 = vunpack.c.l.b16 %v1629
        %v1645 = vunpack.c.l.b16 %v1630
        %v1646 = vunpack.c.l.b16 %v1631
        %v1647 = vunpack.c.l.b16 %v1632
        %v1648 = vpack.c.b16 %v1645, %v1644
        %v1649 = vpack.c.b16 %v1647, %v1646
        %vm1652 = vcmask 261120
        %v1654 = vsel %vm1652, %v1625, 0
        %v1657 = vsel %vm1652, %v1626, 0
        %v1660 = vsel %vm1652, %v1627, 0
        %v1663 = vsel %vm1652, %v1628, 0
        %1665 = vmatprep.subr.bf16.mxu0 0
        %1666 = vmatpush1.bf16.msra.mxu0 %v1648
        %1667 = vmatprep.subr.bf16.mxu0 0
        %1668 = vmatpush1.bf16.msra.mxu0 %v1649
        %1669 = vmatprep.subr.bf16.mxu0 0
        %1670 = vmatpush1.bf16.msra.mxu0 0
        %1671 = vmatprep.subr.bf16.mxu0 0
        %1672 = vmatpush1.bf16.msra.mxu0 0
        %1673 = vmatprep.subr.bf16.mxu0 0
        %1674 = vmatpush1.bf16.msra.mxu0 0
        %1675 = vmatprep.subr.bf16.mxu0 0
        %1676 = vmatpush1.bf16.msra.mxu0 0
        %1677 = vmatprep.subr.bf16.mxu0 0
        %1678 = vmatpush1.bf16.msra.mxu0 0
        %1679 = vmatprep.subr.bf16.mxu0 0
        %1680 = vmatpush1.bf16.msra.mxu0 0
        %1681 = vmatprep.subr.bf16.mxu0 0
        %1682 = vmatpush1.bf16.msra.mxu0 0
        %1683 = vmatprep.subr.bf16.mxu0 0
        %1684 = vmatpush1.bf16.msra.mxu0 0
        %1685 = vmatprep.subr.bf16.mxu0 0
        %1686 = vmatpush1.bf16.msra.mxu0 0
        %1687 = vmatprep.subr.bf16.mxu0 0
        %1688 = vmatpush1.bf16.msra.mxu0 0
        %1689 = vmatprep.subr.bf16.mxu0 0
        %1690 = vmatpush1.bf16.msra.mxu0 0
        %1691 = vmatprep.subr.bf16.mxu0 0
        %1692 = vmatpush1.bf16.msra.mxu0 0
        %1693 = vmatprep.subr.bf16.mxu0 0
        %1694 = vmatpush1.bf16.msra.mxu0 0
        %1695 = vmatprep.subr.bf16.mxu0 0
        %1696 = vmatpush1.bf16.msra.mxu0 0
        %1697 = vmatprep.mubr.bf16.mxu0 0
        %1698 = vmatmul.mubr.bf16.gmra.mrb[0].mxu0 %v1654
        %v1699 = vpop.f32.mrb[0].mxu0
        %v1700 = vadd.f32 %v1638, %v1699
        %v1701 = vpop.f32.mrb[0].mxu0
        %v1702 = vpop.f32.mrb[0].mxu0
        %v1703 = vadd.f32 %v1638, %v1702
        %v1704 = vpop.f32.mrb[0].mxu0
        %1705 = vmatprep.mubr.bf16.mxu0 0
        %1706 = vmatmul.mubr.bf16.gmra.mrb[0].mxu0 %v1657
        %v1707 = vpop.f32.mrb[0].mxu0
        %v1708 = vadd.f32 %v1638, %v1707
        %v1709 = vpop.f32.mrb[0].mxu0
        %v1710 = vpop.f32.mrb[0].mxu0
        %v1711 = vadd.f32 %v1638, %v1710
        %v1712 = vpop.f32.mrb[0].mxu0
        %1713 = vmatprep.mubr.bf16.mxu0 0
        %1714 = vmatmul.mubr.bf16.gmra.mrb[0].mxu0 %v1660
        %v1715 = vpop.f32.mrb[0].mxu0
        %v1716 = vadd.f32 %v1638, %v1715
        %v1717 = vpop.f32.mrb[0].mxu0
        %v1718 = vpop.f32.mrb[0].mxu0
        %v1719 = vadd.f32 %v1638, %v1718
        %v1720 = vpop.f32.mrb[0].mxu0
        %1721 = vmatprep.mubr.bf16.mxu0 0
        %1722 = vmatmul.mubr.bf16.gmra.mrb[0].mxu0 %v1663
        %v1723 = vpop.f32.mrb[0].mxu0
        %v1724 = vadd.f32 %v1638, %v1723
        %v1725 = vpop.f32.mrb[0].mxu0
        %v1726 = vpop.f32.mrb[0].mxu0
        %v1727 = vadd.f32 %v1638, %v1726
        %v1728 = vpop.f32.mrb[0].mxu0
        %1729 = vdwg.mxu0
        %v1730 = vmax.f32 %v1700, 0.0
        %v1731 = vmax.f32 %v1703, 0.0
        %v1732 = vmax.f32 %v1708, 0.0
        %v1733 = vmax.f32 %v1711, 0.0
        %v1734 = vmax.f32 %v1716, 0.0
        %v1735 = vmax.f32 %v1719, 0.0
        %v1736 = vmax.f32 %v1724, 0.0
        %v1737 = vmax.f32 %v1727, 0.0
        %v1738 = vpack.c.bf16 %v1731, %v1730
        %v1739 = vpack.c.bf16 %v1733, %v1732
        %v1740 = vpack.c.bf16 %v1735, %v1734
        %v1741 = vpack.c.bf16 %v1737, %v1736
        %v1742 = vld [vmem:[%s13] sm:$0xf]
        %v1743 = vld [vmem:[%s13 + $0x4] sm:$0xf]
        %v1744 = vld [vmem:[%s13 + $0x8] sm:$0xf]
        %v1745 = vld [vmem:[%s13 + $0xc] sm:$0xf]
        %v1746 = vld [vmem:[#allocation6] sm:$0x1]
        %v1748 = vlaneseq
        %v1749 = vshrl.u32 %v1748, 7
        %v1750 = vsub.s32 0, %v1749
        %v1751 = vrot.slane %v1746, %v1750
        %v1757 = vunpack.c.l.b16 %v1742
        %v1758 = vunpack.c.l.b16 %v1743
        %v1759 = vunpack.c.l.b16 %v1744
        %v1760 = vunpack.c.l.b16 %v1745
        %v1761 = vpack.c.b16 %v1758, %v1757
        %v1762 = vpack.c.b16 %v1760, %v1759
        %v1766 = vsel %vm1652, %v1738, 0
        %v1769 = vsel %vm1652, %v1739, 0
        %v1772 = vsel %vm1652, %v1740, 0
        %v1775 = vsel %vm1652, %v1741, 0
        %1777 = vmatprep.subr.bf16.mxu0 0
        %1778 = vmatpush1.bf16.msra.mxu0 %v1761
        %1779 = vmatprep.subr.bf16.mxu0 0
        %1780 = vmatpush1.bf16.msra.mxu0 %v1762
        %1781 = vmatprep.subr.bf16.mxu0 0
        %1782 = vmatpush1.bf16.msra.mxu0 0
        %1783 = vmatprep.subr.bf16.mxu0 0
        %1784 = vmatpush1.bf16.msra.mxu0 0
        %1785 = vmatprep.subr.bf16.mxu0 0
        %1786 = vmatpush1.bf16.msra.mxu0 0
        %1787 = vmatprep.subr.bf16.mxu0 0
        %1788 = vmatpush1.bf16.msra.mxu0 0
        %1789 = vmatprep.subr.bf16.mxu0 0
        %1790 = vmatpush1.bf16.msra.mxu0 0
        %1791 = vmatprep.subr.bf16.mxu0 0
        %1792 = vmatpush1.bf16.msra.mxu0 0
        %1793 = vmatprep.subr.bf16.mxu0 0
        %1794 = vmatpush1.bf16.msra.mxu0 0
        %1795 = vmatprep.subr.bf16.mxu0 0
        %1796 = vmatpush1.bf16.msra.mxu0 0
        %1797 = vmatprep.subr.bf16.mxu0 0
        %1798 = vmatpush1.bf16.msra.mxu0 0
        %1799 = vmatprep.subr.bf16.mxu0 0
        %1800 = vmatpush1.bf16.msra.mxu0 0
        %1801 = vmatprep.subr.bf16.mxu0 0
        %1802 = vmatpush1.bf16.msra.mxu0 0
        %1803 = vmatprep.subr.bf16.mxu0 0
        %1804 = vmatpush1.bf16.msra.mxu0 0
        %1805 = vmatprep.subr.bf16.mxu0 0
        %1806 = vmatpush1.bf16.msra.mxu0 0
        %1807 = vmatprep.subr.bf16.mxu0 0
        %1808 = vmatpush1.bf16.msra.mxu0 0
        %1809 = vmatprep.mubr.bf16.mxu0 0
        %1810 = vmatmul.mubr.bf16.gmra.mrb[0].mxu0 %v1766
        %v1811 = vpop.f32.mrb[0].mxu0
        %v1812 = vadd.f32 %v1751, %v1811
        %v1813 = vpop.f32.mrb[0].mxu0
        %v1814 = vpop.f32.mrb[0].mxu0
        %v1815 = vadd.f32 %v1751, %v1814
        %v1816 = vpop.f32.mrb[0].mxu0
        %1817 = vmatprep.mubr.bf16.mxu0 0
        %1818 = vmatmul.mubr.bf16.gmra.mrb[0].mxu0 %v1769
        %v1819 = vpop.f32.mrb[0].mxu0
        %v1820 = vadd.f32 %v1751, %v1819
        %v1821 = vpop.f32.mrb[0].mxu0
        %v1822 = vpop.f32.mrb[0].mxu0
        %v1823 = vadd.f32 %v1751, %v1822
        %v1824 = vpop.f32.mrb[0].mxu0
        %1825 = vmatprep.mubr.bf16.mxu0 0
        %1826 = vmatmul.mubr.bf16.gmra.mrb[0].mxu0 %v1772
        %v1827 = vpop.f32.mrb[0].mxu0
        %v1828 = vadd.f32 %v1751, %v1827
        %v1829 = vpop.f32.mrb[0].mxu0
        %v1830 = vpop.f32.mrb[0].mxu0
        %v1831 = vadd.f32 %v1751, %v1830
        %v1832 = vpop.f32.mrb[0].mxu0
        %1833 = vmatprep.mubr.bf16.mxu0 0
        %1834 = vmatmul.mubr.bf16.gmra.mrb[0].mxu0 %v1775
        %v1835 = vpop.f32.mrb[0].mxu0
        %v1836 = vadd.f32 %v1751, %v1835
        %v1837 = vpop.f32.mrb[0].mxu0
        %v1838 = vpop.f32.mrb[0].mxu0
        %v1839 = vadd.f32 %v1751, %v1838
        %v1840 = vpop.f32.mrb[0].mxu0
        %1841 = vdwg.mxu0
        %vm1842 = vcmp.lt.s32.totalorder %v861, 300
        %vm1843 = vcmp.lt.s32.totalorder %v862, 300
        %vm1844 = vcmp.lt.s32.totalorder %v863, 300
        %vm1845 = vcmp.lt.s32.totalorder %v864, 300
        %vm1846 = vcmp.lt.s32.totalorder %v865, 300
        %vm1847 = vcmp.lt.s32.totalorder %v866, 300
        %vm1848 = vcmp.lt.s32.totalorder %v867, 300
        %vm1849 = vcmp.lt.s32.totalorder %v868, 300
        %v1850 = vld [vmem:[#allocation4] sm:$0x1]
        %v1851 = vld [vmem:[%s825] sm:$0xff]
        %v1852 = vld [vmem:[%s825 + $0x8] sm:$0xff]
        %v1853 = vld [vmem:[%s825 + $0x10] sm:$0xff]
        %v1854 = vld [vmem:[%s825 + $0x18] sm:$0xff]
        %v1855 = vld [vmem:[%s825 + $0x20] sm:$0xff]
        %v1856 = vld [vmem:[%s825 + $0x28] sm:$0xff]
        %v1857 = vld [vmem:[%s825 + $0x30] sm:$0xff]
        %v1858 = vld [vmem:[%s825 + $0x38] sm:$0xff]
        %v1859 = vmax.f32 %v1812, 0.0
        %v1860 = vmax.f32 %v1815, 0.0
        %v1861 = vmax.f32 %v1820, 0.0
        %v1862 = vmax.f32 %v1823, 0.0
        %v1863 = vmax.f32 %v1828, 0.0
        %v1864 = vmax.f32 %v1831, 0.0
        %v1865 = vmax.f32 %v1836, 0.0
        %v1866 = vmax.f32 %v1839, 0.0
        %v1867 = vmul.f32 %v1812, %v1851
        %v1868 = vmul.f32 %v1815, %v1852
        %v1869 = vmul.f32 %v1820, %v1853
        %v1870 = vmul.f32 %v1823, %v1854
        %v1871 = vmul.f32 %v1828, %v1855
        %v1872 = vmul.f32 %v1831, %v1856
        %v1873 = vmul.f32 %v1836, %v1857
        %v1874 = vmul.f32 %v1839, %v1858
        %v1875 = vsub.f32 %v1859, %v1867
        %v1876 = vsub.f32 %v1860, %v1868
        %v1877 = vsub.f32 %v1861, %v1869
        %v1878 = vsub.f32 %v1862, %v1870
        %v1879 = vsub.f32 %v1863, %v1871
        %v1880 = vsub.f32 %v1864, %v1872
        %v1881 = vsub.f32 %v1865, %v1873
        %v1882 = vsub.f32 %v1866, %v1874
        %v1883 = vand.u32 2147483647, %v1812
        %v1884 = vand.u32 2147483647, %v1815
        %v1885 = vand.u32 2147483647, %v1820
        %v1886 = vand.u32 2147483647, %v1823
        %v1887 = vand.u32 2147483647, %v1828
        %v1888 = vand.u32 2147483647, %v1831
        %v1889 = vand.u32 2147483647, %v1836
        %v1890 = vand.u32 2147483647, %v1839
        %v1891 = vsub.f32 0.0, %v1883
        %v1892 = vsub.f32 0.0, %v1884
        %v1893 = vsub.f32 0.0, %v1885
        %v1894 = vsub.f32 0.0, %v1886
        %v1895 = vsub.f32 0.0, %v1887
        %v1896 = vsub.f32 0.0, %v1888
        %v1897 = vsub.f32 0.0, %v1889
        %v1898 = vsub.f32 0.0, %v1890
        %v1899 = vmul.f32 %v1891, 1.442695
        %v1900 = vpow.pop %v1899
        %v1901 = vmul.f32 %v1892, 1.442695
        %v1902 = vpow.pop %v1901
        %v1903 = vmul.f32 %v1893, 1.442695
        %v1904 = vpow.pop %v1903
        %v1905 = vmul.f32 %v1894, 1.442695
        %v1906 = vpow.pop %v1905
        %v1907 = vmul.f32 %v1895, 1.442695
        %v1908 = vpow.pop %v1907
        %v1909 = vmul.f32 %v1896, 1.442695
        %v1910 = vpow.pop %v1909
        %v1911 = vmul.f32 %v1897, 1.442695
        %v1912 = vpow.pop %v1911
        %v1913 = vmul.f32 %v1898, 1.442695
        %v1914 = vpow.pop %v1913
        %v1915 = vadd.f32 %v1900, 1.0
        %v1916 = vlog2.pop %v1915
        %v1917 = vmul.f32 %v1916, 0.6931472
        %v1918 = vmul.f32 -0.5, %v1900
        %v1919 = vadd.f32 %v1918, 1.0
        %v1920 = vmul.f32 %v1919, %v1900
        %v1921 = vand.u32 2147483647, %v1900
        %vm1922 = vcmp.lt.f32.partialorder %v1921, 0.0004427343
        %v1923 = vsel %vm1922, %v1920, %v1917
        %v1924 = vadd.f32 %v1902, 1.0
        %v1925 = vlog2.pop %v1924
        %v1926 = vmul.f32 %v1925, 0.6931472
        %v1927 = vmul.f32 -0.5, %v1902
        %v1928 = vadd.f32 %v1927, 1.0
        %v1929 = vmul.f32 %v1928, %v1902
        %v1930 = vand.u32 2147483647, %v1902
        %vm1931 = vcmp.lt.f32.partialorder %v1930, 0.0004427343
        %v1932 = vsel %vm1931, %v1929, %v1926
        %v1933 = vadd.f32 %v1904, 1.0
        %v1934 = vlog2.pop %v1933
        %v1935 = vmul.f32 %v1934, 0.6931472
        %v1936 = vmul.f32 -0.5, %v1904
        %v1937 = vadd.f32 %v1936, 1.0
        %v1938 = vmul.f32 %v1937, %v1904
        %v1939 = vand.u32 2147483647, %v1904
        %vm1940 = vcmp.lt.f32.partialorder %v1939, 0.0004427343
        %v1941 = vsel %vm1940, %v1938, %v1935
        %v1942 = vadd.f32 %v1906, 1.0
        %v1943 = vlog2.pop %v1942
        %v1944 = vmul.f32 %v1943, 0.6931472
        %v1945 = vmul.f32 -0.5, %v1906
        %v1946 = vadd.f32 %v1945, 1.0
        %v1947 = vmul.f32 %v1946, %v1906
        %v1948 = vand.u32 2147483647, %v1906
        %vm1949 = vcmp.lt.f32.partialorder %v1948, 0.0004427343
        %v1950 = vsel %vm1949, %v1947, %v1944
        %v1951 = vadd.f32 %v1908, 1.0
        %v1952 = vlog2.pop %v1951
        %v1953 = vmul.f32 %v1952, 0.6931472
        %v1954 = vmul.f32 -0.5, %v1908
        %v1955 = vadd.f32 %v1954, 1.0
        %v1956 = vmul.f32 %v1955, %v1908
        %v1957 = vand.u32 2147483647, %v1908
        %vm1958 = vcmp.lt.f32.partialorder %v1957, 0.0004427343
        %v1959 = vsel %vm1958, %v1956, %v1953
        %v1960 = vadd.f32 %v1910, 1.0
        %v1961 = vlog2.pop %v1960
        %v1962 = vmul.f32 %v1961, 0.6931472
        %v1963 = vmul.f32 -0.5, %v1910
        %v1964 = vadd.f32 %v1963, 1.0
        %v1965 = vmul.f32 %v1964, %v1910
        %v1966 = vand.u32 2147483647, %v1910
        %vm1967 = vcmp.lt.f32.partialorder %v1966, 0.0004427343
        %v1968 = vsel %vm1967, %v1965, %v1962
        %v1969 = vadd.f32 %v1912, 1.0
        %v1970 = vlog2.pop %v1969
        %v1971 = vmul.f32 %v1970, 0.6931472
        %v1972 = vmul.f32 -0.5, %v1912
        %v1973 = vadd.f32 %v1972, 1.0
        %v1974 = vmul.f32 %v1973, %v1912
        %v1975 = vand.u32 2147483647, %v1912
        %vm1976 = vcmp.lt.f32.partialorder %v1975, 0.0004427343
        %v1977 = vsel %vm1976, %v1974, %v1971
        %v1978 = vadd.f32 %v1914, 1.0
        %v1979 = vlog2.pop %v1978
        %v1980 = vmul.f32 %v1979, 0.6931472
        %v1981 = vmul.f32 -0.5, %v1914
        %v1982 = vadd.f32 %v1981, 1.0
        %v1983 = vmul.f32 %v1982, %v1914
        %v1984 = vand.u32 2147483647, %v1914
        %vm1985 = vcmp.lt.f32.partialorder %v1984, 0.0004427343
        %v1986 = vsel %vm1985, %v1983, %v1980
        %v1987 = vadd.f32 %v1875, %v1923
        %v1988 = vadd.f32 %v1876, %v1932
        %v1989 = vadd.f32 %v1877, %v1941
        %v1990 = vadd.f32 %v1878, %v1950
        %v1991 = vadd.f32 %v1879, %v1959
        %v1992 = vadd.f32 %v1880, %v1968
        %v1993 = vadd.f32 %v1881, %v1977
        %v1994 = vadd.f32 %v1882, %v1986
        %v1995 = vsel %vm1842, %v1987, 0.0
        %v1996 = vsel %vm1843, %v1988, 0.0
        %v1997 = vsel %vm1844, %v1989, 0.0
        %v1998 = vsel %vm1845, %v1990, 0.0
        %v1999 = vsel %vm1846, %v1991, 0.0
        %v2000 = vsel %vm1847, %v1992, 0.0
        %v2001 = vsel %vm1848, %v1993, 0.0
        %v2002 = vsel %vm1849, %v1994, 0.0
        %v2003 = vadd.f32 %v1995, 0.0
        %v2004 = vadd.f32 %v1996, 0.0
        %v2005 = vadd.f32 %v1997, 0.0
        %v2006 = vadd.f32 %v1998, 0.0
        %v2007 = vadd.f32 %v1999, 0.0
        %v2008 = vadd.f32 %v2000, 0.0
        %v2009 = vadd.f32 %v2001, 0.0
        %v2010 = vadd.f32 %v2002, 0.0
        %vm2011 = vcmask 7168
        %v2012 = vsel %vm2011, %v2003, 0.0
        %v2013 = vsel %vm2011, %v2004, 0.0
        %v2014 = vadd.f32 %v2012, %v2013
        %v2015 = vsel %vm2011, %v2005, 0.0
        %v2016 = vadd.f32 %v2014, %v2015
        %v2017 = vsel %vm2011, %v2006, 0.0
        %v2018 = vadd.f32 %v2016, %v2017
        %v2019 = vsel %vm2011, %v2007, 0.0
        %v2020 = vadd.f32 %v2018, %v2019
        %v2021 = vsel %vm2011, %v2008, 0.0
        %v2022 = vadd.f32 %v2020, %v2021
        %v2023 = vsel %vm2011, %v2009, 0.0
        %v2024 = vadd.f32 %v2022, %v2023
        %v2025 = vsel %vm2011, %v2010, 0.0
        %v2026 = vadd.f32 %v2024, %v2025
        %v2027 = vrot.slane %v2026, 4
        %v2028 = vadd.f32 %v2026, %v2027
        %v2029 = vrot.slane %v2028, 2
        %v2030 = vadd.f32 %v2028, %v2029
        %v2031 = vrot.slane %v2030, 1
        %v2032 = vadd.f32 %v2030, %v2031
        %v2033 = vadd.f32 %v1850, %v2032
        %vm2034 = vcmask 0
        %2035 = vst.msk [vmem:[#allocation4] sm:$0x1] %vm2034, %v2033
      $region92: #{comp_identify_forward.1} parent=79 // pred_fallthru
        _
      %p2036 = scmp.eq.s32.totalorder %s35, 2
      // Predicated region
      $region93: #{comp_identify_forward.1} parent=79 // pred_check
        %p2037 = pneg %p2036
      $region94: #{comp_identify_forward.1} parent=79 // pred_check_branch
        %2039 = sbr.rel (%p2037) target = $region96
      $region95: #{comp_identify_forward.1} parent=79 // pred_region
        %v2040 = vld [vmem:[#allocation2] sm:$0x1]
        %v2041 = vmul.f32 %v2040, 0.00012820512
        %v2042 = vld [vmem:[#allocation3] sm:$0x1]
        %v2043 = vmul.f32 %v2042, 0.005
        %v2044 = vld [vmem:[#allocation4] sm:$0x1]
        %v2045 = vmul.f32 %v2044, 0.0033333334
        %v2046 = vadd.f32 %v2041, %v2045
        %v2047 = vadd.f32 %v2046, %v2043
        %v2048 = vlaneseq
        %v2049 = vand.u32 %v2048, 127
        %vm2050 = vcmp.eq.s32.totalorder %v2049, 0
        %v2052 = vlaneseq
        %v2053 = vshrl.u32 %v2052, 7
        %v2054 = vsub.s32 0, %v2053
        %v2055 = vrot.slane %v2047, %v2054
        %2056 = vset.pattern.permute.xlu0 0
        %2057 = vperm.xlu0 %2056, %v2055
        %v2058 = vpop.permute.xlu0 %2057
        %v2060 = vsel %vm2050, %v2058, 0.0
        %vm2061 = vcmp.eq.s32.totalorder %v2049, 1
        %v2063 = vlaneseq
        %v2064 = vshrl.u32 %v2063, 7
        %v2065 = vsub.s32 0, %v2064
        %v2066 = vrot.slane %v2041, %v2065
        %2067 = vset.pattern.permute.xlu0 0
        %2068 = vperm.xlu0 %2067, %v2066
        %v2069 = vpop.permute.xlu0 %2068
        %v2071 = vsel %vm2061, %v2069, 0.0
        %v2072 = vadd.f32 %v2060, %v2071
        %vm2073 = vcmp.eq.s32.totalorder %v2049, 2
        %v2075 = vlaneseq
        %v2076 = vshrl.u32 %v2075, 7
        %v2077 = vsub.s32 0, %v2076
        %v2078 = vrot.slane %v2045, %v2077
        %2079 = vset.pattern.permute.xlu0 0
        %2080 = vperm.xlu0 %2079, %v2078
        %v2081 = vpop.permute.xlu0 %2080
        %v2083 = vsel %vm2073, %v2081, 0.0
        %v2084 = vadd.f32 %v2072, %v2083
        %vm2085 = vcmp.eq.s32.totalorder %v2049, 3
        %v2087 = vlaneseq
        %v2088 = vshrl.u32 %v2087, 7
        %v2089 = vsub.s32 0, %v2088
        %v2090 = vrot.slane %v2043, %v2089
        %2091 = vset.pattern.permute.xlu0 0
        %2092 = vperm.xlu0 %2091, %v2090
        %v2093 = vpop.permute.xlu0 %2092
        %v2095 = vsel %vm2085, %v2093, 0.0
        %v2096 = vadd.f32 %v2084, %v2095
        %2097 = vst [vmem:[%s838] sm:$0xff] %v2096
      $region96: #{comp_identify_forward.1} parent=79 // pred_fallthru
        _
      %p2098 = scmp.lt.s32.totalorder %s34, 1
      %s2099 = scalar_select %p2098, %s34, 1
      %s2100 = smul.addr %s2099, 8
      %s2101 = scalar_lea.vmem %s15, %s2100
      // Predicated region
      $region97: #{comp_identify_forward.1} parent=79 // pred_check
        %p2102 = pneg %p440
      $region98: #{comp_identify_forward.1} parent=79 // pred_check_branch
        %2104 = sbr.rel (%p2102) target = $region100
      $region99: #{comp_identify_forward.1} parent=79 // pred_region
        _
      $region100: #{comp_identify_forward.1} parent=79 // pred_fallthru
        _
    $region80: #{comp_identify_forward.1} parent=5 // pred_fallthru
      _
    %p2105 = scmp.le.s32.totalorder 2, %s25
    // Predicated region
    $region101: #{comp_identify_forward.1} parent=5 // pred_check
      %p2106 = pneg %p2105
    $region102: #{comp_identify_forward.1} parent=5 // pred_check_branch
      %2108 = sbr.rel (%p2106) target = $region104
    $region103: #{comp_identify_forward.1} parent=5 // pred_region
      %s2109 = ssub.s32 %s25, 2
      // Predicated region
      $region105: #{comp_identify_forward.1} parent=103 // pred_check
        %p2110 = pneg %p446
      $region106: #{comp_identify_forward.1} parent=103 // pred_check_branch
        %2112 = sbr.rel (%p2110) target = $region108
      $region107: #{comp_identify_forward.1} parent=103 // pred_region
        %p2113 = scmp.lt.s32.totalorder %s36, 1
        %s2114 = scalar_select %p2113, %s36, 1
        %s2115 = smul.addr %s2114, 8
        %s2116 = scalar_lea.vmem %s15, %s2115
      $region108: #{comp_identify_forward.1} parent=103 // pred_fallthru
        _
    $region104: #{comp_identify_forward.1} parent=5 // pred_fallthru
      _
  $region6: #{comp_identify_forward.1} parent=0 // loop_footer
    %s29 = sadd.s32 1, %s25
  $region7: #{comp_identify_forward.1} parent=0 // loop_footer_branch
    %24 = sbr.rel target = $region3
  $region8: #{comp_identify_forward.1} parent=0 // loop_exit
    _

</llo_original>
